<compile_context>
chip_gen: v6e
topology: v6e:2x2x1
jax: 0.10.0
libtpu: 0.0.40
codegen_flags: <defaults>
</compile_context>

<pallas_src>
import functools

import jax
import jax.numpy as jnp
from jax.experimental import pallas as pl
from jax.experimental.pallas import tpu as pltpu

INV_SQRT2 = 0.7071067811865476
SQRT_2_OVER_PI = 0.7978845608028654
GELU_C2 = SQRT_2_OVER_PI * 0.044715


def conv_encoder_kernel(xpad_ref, dww_ref, w1_ref, b1_ref, w2_ref, b2_ref,
                        out_ref, *, kernel_size):
    # xpad_ref: (Hp, Wp, C) f32   padded input for this batch element (batch squeezed)
    # dww_ref : (K, K, C)   f32   depthwise conv weight
    # w1_ref  : (C, HID)    bf16  pwconv1 weight (BN scale folded in)
    # b1_ref  : (1, HID)    f32   pwconv1 bias  (dw-bias + BN shift folded in)
    # w2_ref  : (HID, C)    bf16  pwconv2 weight (layer_scale folded in)
    # b2_ref  : (1, C)      f32   pwconv2 bias  (layer_scale folded in)
    # out_ref : (TH, W, C)  f32   one row band of the output
    K = kernel_size
    pad = K // 2
    TH, W, C = out_ref.shape

    # First row of this band inside the padded image.
    row0 = pl.multiple_of(pl.program_id(1) * TH, TH)

    # Hoisted tap extracts (9 static (C,) slices, done once per invocation).
    dw = dww_ref[...]                                         # (K, K, C)
    taps = [[dw[ky, kx] for kx in range(K)] for ky in range(K)]

    # ---- depthwise KxK conv --------------------------------------------------
    # Each ky slab is loaded once at full padded width (aligned start on the
    # sublane axis); the kx shifts are in-register static slices, and the
    # (ky=pad, kx=pad) window doubles as the residual.
    # NOTE: on v6e/v7x this MAC could run in bf16 (bf16 VALU); kept f32 for
    # accuracy and v5e portability.
    y = None
    res = None
    for ky in range(K):
        slab = xpad_ref[pl.ds(row0 + ky, TH), :, :]           # (TH, Wp, C)
        for kx in range(K):
            win = slab[:, kx:kx + W, :]                       # (TH, W, C)
            if ky == pad and kx == pad:
                res = win                                     # residual reuse
            t = win * taps[ky][kx]
            y = t if y is None else y + t

    # ---- pwconv1 (MXU, bf16 operands, f32 accumulate); BN already folded ----
    # The reshape is a free relayout when W % 8 == 0.
    h = jnp.dot(y.reshape(TH * W, C).astype(jnp.bfloat16), w1_ref[...],
                preferred_element_type=jnp.float32) + b1_ref[...]

    # ---- GELU (tanh approximation, cubic folded; tanh runs on the EUP) ------
    g = 0.5 * h * (1.0 + jnp.tanh(h * (SQRT_2_OVER_PI + GELU_C2 * (h * h))))

    # ---- pwconv2 (MXU); layer_scale already folded into w2/b2 ---------------
    z = jnp.dot(g.astype(jnp.bfloat16), w2_ref[...],
                preferred_element_type=jnp.float32) + b2_ref[...]

    # ---- residual (reused center window) + store ----------------------------
    out_ref[...] = res + z.reshape(TH, W, C)


def _round_up(x, m):
    return (x + m - 1) // m * m


def _padded_bytes(shape, itemsize):
    """Rough physical VMEM footprint of an array under (8,128) tiling."""
    if len(shape) == 0:
        return itemsize
    if len(shape) == 1:
        return _round_up(int(shape[0]), 128) * 8 * itemsize
    lead = 1
    for d in shape[:-2]:
        lead *= int(d)
    return (lead * _round_up(int(shape[-2]), 8) * _round_up(int(shape[-1]), 128)
            * itemsize)


def _pick_row_chunk(H, W):
    """Largest row band TH that divides H, is sublane-aligned (multiple of 8),
    and keeps TH*W <= 1024 (fills the 256-wide MXU on v6e/v7x without blowing
    up the (TH*W, HID) f32 intermediate)."""
    if H % 8 != 0:
        return H                # fall back to a single band
    best = 8
    for th in range(8, H + 1, 8):
        if H % th == 0 and th * W <= 1024:
            best = th
    return best


def conv_encoder_pallas(x_nchw, params, kernel_size=3, bn_eps=1e-5):
    """x_nchw: (B, C, H, W) float32. Returns (B, C, H, W)."""
    B, C, H, W = x_nchw.shape
    K = kernel_size
    pad = K // 2
    HID = params["w1"].shape[1]
    Hp, Wp = H + K - 1, W + K - 1

    TH = _pick_row_chunk(H, W)
    NB = H // TH

    # NCHW -> NHWC + spatial halo pad (boundary glue for the NCHW interface).
    # TODO(synk): keep the surrounding model NHWC and fold the halo pad into the
    # kernel (manual band DMA + masked borders) to drop these extra HBM passes;
    # for very large feature maps also switch xpad to memory_space=pl.ANY and
    # manually double-buffer (TH+K-1)-row bands so v7x's 64 MiB VMEM is enough.
    x = jnp.transpose(x_nchw, (0, 2, 3, 1)).astype(jnp.float32)
    xpad = jnp.pad(x, ((0, 0), (pad, pad), (pad, pad), (0, 0)))

    # ---- host-side folding of all affine ops into the pointwise weights ----
    s = params["bn_gamma"] / jnp.sqrt(params["bn_var"] + bn_eps)            # (C,)
    shift = (params["dwb"] - params["bn_mean"]) * s + params["bn_beta"]     # (C,)
    w1_eff = (s[:, None] * params["w1"]).astype(jnp.bfloat16)               # (C, HID)
    b1_eff = (params["b1"] + shift @ params["w1"]).reshape(1, HID)          # (1, HID)
    ls = params["layer_scale"]                                              # (C,)
    w2_eff = (params["w2"] * ls[None, :]).astype(jnp.bfloat16)              # (HID, C)
    b2_eff = (params["b2"] * ls).reshape(1, C)                              # (1, C)
    dww = params["dww"]                                                     # (K, K, C)

    # Explicit VMEM budget: double-buffered blocks + weights + live intermediates.
    est = (2 * (_padded_bytes((Hp, Wp, C), 4) + _padded_bytes((TH, W, C), 4))
           + 2 * (_padded_bytes((K, K, C), 4) + _padded_bytes((C, HID), 2)
                  + _padded_bytes((1, HID), 4) + _padded_bytes((HID, C), 2)
                  + _padded_bytes((1, C), 4))
           + 6 * max(_padded_bytes((TH, W, C), 4),
                     _padded_bytes((TH * W, HID), 4)))
    vmem_limit = int(min(64 << 20, max(est + (8 << 20), 16 << 20)))

    kernel = functools.partial(conv_encoder_kernel, kernel_size=K)

    out = pl.pallas_call(
        kernel,
        out_shape=jax.ShapeDtypeStruct((B, H, W, C), jnp.float32),
        grid_spec=pltpu.PrefetchScalarGridSpec(
            num_scalar_prefetch=0,
            grid=(B, NB),
            in_specs=[
                # Full padded image per batch element; the block index is
                # constant across the band axis -> revisited, not re-fetched.
                pl.BlockSpec((None, Hp, Wp, C), lambda b, r: (b, 0, 0, 0)),
                pl.BlockSpec((K, K, C), lambda b, r: (0, 0, 0)),
                pl.BlockSpec((C, HID), lambda b, r: (0, 0)),
                pl.BlockSpec((1, HID), lambda b, r: (0, 0)),
                pl.BlockSpec((HID, C), lambda b, r: (0, 0)),
                pl.BlockSpec((1, C), lambda b, r: (0, 0)),
            ],
            out_specs=pl.BlockSpec((None, TH, W, C), lambda b, r: (b, r, 0, 0)),
        ),
        compiler_params=pltpu.CompilerParams(
            dimension_semantics=("parallel", "parallel"),
            vmem_limit_bytes=vmem_limit),
    )(xpad, dww, w1_eff, b1_eff, w2_eff, b2_eff)

    # NHWC -> NCHW
    return jnp.transpose(out, (0, 3, 1, 2))


def make_params(key, dim, hidden_dim, kernel_size):
    """Deterministic synthetic parameters (module __init__ shapes; nontrivial
    biases / BN stats so the host-side folding is actually exercised)."""
    K = kernel_size
    keys = jax.random.split(key, 8)
    dww_t = jax.random.normal(keys[0], (dim, 1, K, K), jnp.float32) * 0.02   # torch (O,1,K,K)
    w1_t = jax.random.normal(keys[1], (hidden_dim, dim, 1, 1), jnp.float32) * 0.02
    w2_t = jax.random.normal(keys[2], (dim, hidden_dim, 1, 1), jnp.float32) * 0.02
    dwb = jax.random.normal(keys[3], (dim,), jnp.float32) * 0.02
    b1 = jax.random.normal(keys[4], (hidden_dim,), jnp.float32) * 0.02
    b2 = jax.random.normal(keys[5], (dim,), jnp.float32) * 0.02
    bn_gamma = 1.0 + 0.1 * jax.random.normal(keys[6], (dim,), jnp.float32)
    bn_beta = 0.05 * jax.random.normal(keys[7], (dim,), jnp.float32)
    bn_mean = 0.1 * jnp.arange(dim, dtype=jnp.float32) / max(dim, 1)
    bn_var = 1.0 + 0.2 * jnp.cos(jnp.arange(dim, dtype=jnp.float32))
    layer_scale = jnp.ones((dim,), jnp.float32)   # module init: ones

    return {
        "dww": jnp.transpose(dww_t[:, 0, :, :], (1, 2, 0)),   # (K, K, dim)
        "dwb": dwb,
        "bn_gamma": bn_gamma, "bn_beta": bn_beta,
        "bn_mean": bn_mean, "bn_var": bn_var,
        "w1": jnp.transpose(w1_t[:, :, 0, 0], (1, 0)),        # (dim, hidden)
        "b1": b1,
        "w2": jnp.transpose(w2_t[:, :, 0, 0], (1, 0)),        # (hidden, dim)
        "b2": b2,
        "layer_scale": layer_scale,
        # raw torch-layout weights kept only for the reference check
        "_dww_t": dww_t, "_w1_t": w1_t, "_w2_t": w2_t,
    }


def conv_encoder_ref(x, p, kernel_size=3, bn_eps=1e-5):
    """Plain-JAX NCHW reference (mirrors the PyTorch forward, eval-mode BN, exact GELU)."""
    pad = kernel_size // 2
    C = x.shape[1]
    y = jax.lax.conv_general_dilated(
        x, p["_dww_t"], window_strides=(1, 1), padding=[(pad, pad), (pad, pad)],
        dimension_numbers=("NCHW", "OIHW", "NCHW"), feature_group_count=C)
    y = y + p["dwb"].reshape(1, C, 1, 1)
    s = p["bn_gamma"] / jnp.sqrt(p["bn_var"] + bn_eps)
    y = (y - p["bn_mean"].reshape(1, C, 1, 1)) * s.reshape(1, C, 1, 1) \
        + p["bn_beta"].reshape(1, C, 1, 1)
    h = jax.lax.conv_general_dilated(
        y, p["_w1_t"], (1, 1), "VALID", dimension_numbers=("NCHW", "OIHW", "NCHW"))
    h = h + p["b1"].reshape(1, -1, 1, 1)
    h = 0.5 * h * (1.0 + jax.lax.erf(h * INV_SQRT2))
    z = jax.lax.conv_general_dilated(
        h, p["_w2_t"], (1, 1), "VALID", dimension_numbers=("NCHW", "OIHW", "NCHW"))
    z = z + p["b2"].reshape(1, C, 1, 1)
    return x + p["layer_scale"].reshape(1, C, 1, 1) * z


if __name__ == "__main__":
    B, C, H, W = 2, 4, 16, 16
    HIDDEN = 32
    K = 3

    key = jax.random.PRNGKey(0)
    kx, kp = jax.random.split(key)
    x = jax.random.normal(kx, (B, C, H, W), jnp.float32)
    params = make_params(kp, C, HIDDEN, K)

    out = jax.block_until_ready(conv_encoder_pallas(x, params, kernel_size=K))
    ref = jax.block_until_ready(conv_encoder_ref(x, params, kernel_size=K))

    assert out.shape == (B, C, H, W)
    assert jnp.allclose(out, ref, atol=1e-2, rtol=1e-2), "mismatch vs reference"

    print("KERNEL_OK")
</pallas_src>

<mosaic_0001>
module attributes {stable_mosaic.version = 11 : i64} {
  func.func @conv_encoder_kernel(%arg0: i32, %arg1: i32, %arg2: memref<1x18x18x4xf32, #tpu.memory_space<vmem>>, %arg3: memref<3x3x4xf32, #tpu.memory_space<vmem>>, %arg4: memref<4x32xbf16, #tpu.memory_space<vmem>>, %arg5: memref<1x32xf32, #tpu.memory_space<vmem>>, %arg6: memref<32x4xbf16, #tpu.memory_space<vmem>>, %arg7: memref<1x4xf32, #tpu.memory_space<vmem>>, %arg8: memref<1x16x16x4xf32, #tpu.memory_space<vmem>>) attributes {dimension_semantics = [#tpu.dimension_semantics<parallel>, #tpu.dimension_semantics<parallel>], iteration_bounds = array<i64: 2, 1>, scalar_prefetch = 0 : i64, scratch_operands = 0 : i64, tpu.core_type = #tpu.core_type<tc>, window_params = [{transform_indices = @transform_0, window_bounds = array<i64: 1, 18, 18, 4>}, {pipeline_mode = #tpu.pipeline_mode<synchronous>, transform_indices = @transform_1, window_bounds = array<i64: 3, 3, 4>}, {pipeline_mode = #tpu.pipeline_mode<synchronous>, transform_indices = @transform_2, window_bounds = array<i64: 4, 32>}, {pipeline_mode = #tpu.pipeline_mode<synchronous>, transform_indices = @transform_3, window_bounds = array<i64: 1, 32>}, {pipeline_mode = #tpu.pipeline_mode<synchronous>, transform_indices = @transform_4, window_bounds = array<i64: 32, 4>}, {pipeline_mode = #tpu.pipeline_mode<synchronous>, transform_indices = @transform_5, window_bounds = array<i64: 1, 4>}, {transform_indices = @transform_6, window_bounds = array<i64: 1, 16, 16, 4>}]} {
    %c16_i32 = arith.constant 16 : i32
    %0 = arith.muli %arg1, %c16_i32 : i32
    %1 = tpu.assume_multiple %0, 16 : i32
    %c0 = arith.constant 0 : index
    %c0_0 = arith.constant 0 : index
    %c0_1 = arith.constant 0 : index
    %2 = vector.load %arg3[%c0, %c0_0, %c0_1] : memref<3x3x4xf32, #tpu.memory_space<vmem>>, vector<3x3x4xf32>
    %3 = vector.extract_strided_slice %2 {offsets = [0, 0, 0], sizes = [1, 1, 4], strides = [1, 1, 1]} : vector<3x3x4xf32> to vector<1x1x4xf32>
    %4 = vector.shape_cast %3 : vector<1x1x4xf32> to vector<4xf32>
    %5 = vector.extract_strided_slice %2 {offsets = [0, 1, 0], sizes = [1, 1, 4], strides = [1, 1, 1]} : vector<3x3x4xf32> to vector<1x1x4xf32>
    %6 = vector.shape_cast %5 : vector<1x1x4xf32> to vector<4xf32>
    %7 = vector.extract_strided_slice %2 {offsets = [0, 2, 0], sizes = [1, 1, 4], strides = [1, 1, 1]} : vector<3x3x4xf32> to vector<1x1x4xf32>
    %8 = vector.shape_cast %7 : vector<1x1x4xf32> to vector<4xf32>
    %9 = vector.extract_strided_slice %2 {offsets = [1, 0, 0], sizes = [1, 1, 4], strides = [1, 1, 1]} : vector<3x3x4xf32> to vector<1x1x4xf32>
    %10 = vector.shape_cast %9 : vector<1x1x4xf32> to vector<4xf32>
    %11 = vector.extract_strided_slice %2 {offsets = [1, 1, 0], sizes = [1, 1, 4], strides = [1, 1, 1]} : vector<3x3x4xf32> to vector<1x1x4xf32>
    %12 = vector.shape_cast %11 : vector<1x1x4xf32> to vector<4xf32>
    %13 = vector.extract_strided_slice %2 {offsets = [1, 2, 0], sizes = [1, 1, 4], strides = [1, 1, 1]} : vector<3x3x4xf32> to vector<1x1x4xf32>
    %14 = vector.shape_cast %13 : vector<1x1x4xf32> to vector<4xf32>
    %15 = vector.extract_strided_slice %2 {offsets = [2, 0, 0], sizes = [1, 1, 4], strides = [1, 1, 1]} : vector<3x3x4xf32> to vector<1x1x4xf32>
    %16 = vector.shape_cast %15 : vector<1x1x4xf32> to vector<4xf32>
    %17 = vector.extract_strided_slice %2 {offsets = [2, 1, 0], sizes = [1, 1, 4], strides = [1, 1, 1]} : vector<3x3x4xf32> to vector<1x1x4xf32>
    %18 = vector.shape_cast %17 : vector<1x1x4xf32> to vector<4xf32>
    %19 = vector.extract_strided_slice %2 {offsets = [2, 2, 0], sizes = [1, 1, 4], strides = [1, 1, 1]} : vector<3x3x4xf32> to vector<1x1x4xf32>
    %20 = vector.shape_cast %19 : vector<1x1x4xf32> to vector<4xf32>
    %c0_i32 = arith.constant 0 : i32
    %21 = arith.addi %1, %c0_i32 : i32
    %c0_2 = arith.constant 0 : index
    %22 = arith.index_cast %21 : i32 to index
    %c0_3 = arith.constant 0 : index
    %c0_4 = arith.constant 0 : index
    %23 = vector.load %arg2[%c0_2, %22, %c0_3, %c0_4] : memref<1x18x18x4xf32, #tpu.memory_space<vmem>>, vector<1x16x18x4xf32>
    %24 = vector.shape_cast %23 : vector<1x16x18x4xf32> to vector<16x18x4xf32>
    %25 = vector.extract_strided_slice %24 {offsets = [0, 0, 0], sizes = [16, 16, 4], strides = [1, 1, 1]} : vector<16x18x4xf32> to vector<16x16x4xf32>
    %26 = vector.shape_cast %4 : vector<4xf32> to vector<1x1x4xf32>
    %27 = vector.broadcast %26 : vector<1x1x4xf32> to vector<16x16x4xf32>
    %28 = arith.mulf %25, %27 : vector<16x16x4xf32>
    %29 = vector.extract_strided_slice %24 {offsets = [0, 1, 0], sizes = [16, 16, 4], strides = [1, 1, 1]} : vector<16x18x4xf32> to vector<16x16x4xf32>
    %30 = vector.shape_cast %6 : vector<4xf32> to vector<1x1x4xf32>
    %31 = vector.broadcast %30 : vector<1x1x4xf32> to vector<16x16x4xf32>
    %32 = arith.mulf %29, %31 : vector<16x16x4xf32>
    %33 = arith.addf %28, %32 : vector<16x16x4xf32>
    %34 = vector.extract_strided_slice %24 {offsets = [0, 2, 0], sizes = [16, 16, 4], strides = [1, 1, 1]} : vector<16x18x4xf32> to vector<16x16x4xf32>
    %35 = vector.shape_cast %8 : vector<4xf32> to vector<1x1x4xf32>
    %36 = vector.broadcast %35 : vector<1x1x4xf32> to vector<16x16x4xf32>
    %37 = arith.mulf %34, %36 : vector<16x16x4xf32>
    %38 = arith.addf %33, %37 : vector<16x16x4xf32>
    %c1_i32 = arith.constant 1 : i32
    %39 = arith.addi %1, %c1_i32 : i32
    %c0_5 = arith.constant 0 : index
    %40 = arith.index_cast %39 : i32 to index
    %c0_6 = arith.constant 0 : index
    %c0_7 = arith.constant 0 : index
    %41 = vector.load %arg2[%c0_5, %40, %c0_6, %c0_7] : memref<1x18x18x4xf32, #tpu.memory_space<vmem>>, vector<1x16x18x4xf32>
    %42 = vector.shape_cast %41 : vector<1x16x18x4xf32> to vector<16x18x4xf32>
    %43 = vector.extract_strided_slice %42 {offsets = [0, 0, 0], sizes = [16, 16, 4], strides = [1, 1, 1]} : vector<16x18x4xf32> to vector<16x16x4xf32>
    %44 = vector.shape_cast %10 : vector<4xf32> to vector<1x1x4xf32>
    %45 = vector.broadcast %44 : vector<1x1x4xf32> to vector<16x16x4xf32>
    %46 = arith.mulf %43, %45 : vector<16x16x4xf32>
    %47 = arith.addf %38, %46 : vector<16x16x4xf32>
    %48 = vector.extract_strided_slice %42 {offsets = [0, 1, 0], sizes = [16, 16, 4], strides = [1, 1, 1]} : vector<16x18x4xf32> to vector<16x16x4xf32>
    %49 = vector.shape_cast %12 : vector<4xf32> to vector<1x1x4xf32>
    %50 = vector.broadcast %49 : vector<1x1x4xf32> to vector<16x16x4xf32>
    %51 = arith.mulf %48, %50 : vector<16x16x4xf32>
    %52 = arith.addf %47, %51 : vector<16x16x4xf32>
    %53 = vector.extract_strided_slice %42 {offsets = [0, 2, 0], sizes = [16, 16, 4], strides = [1, 1, 1]} : vector<16x18x4xf32> to vector<16x16x4xf32>
    %54 = vector.shape_cast %14 : vector<4xf32> to vector<1x1x4xf32>
    %55 = vector.broadcast %54 : vector<1x1x4xf32> to vector<16x16x4xf32>
    %56 = arith.mulf %53, %55 : vector<16x16x4xf32>
    %57 = arith.addf %52, %56 : vector<16x16x4xf32>
    %c2_i32 = arith.constant 2 : i32
    %58 = arith.addi %1, %c2_i32 : i32
    %c0_8 = arith.constant 0 : index
    %59 = arith.index_cast %58 : i32 to index
    %c0_9 = arith.constant 0 : index
    %c0_10 = arith.constant 0 : index
    %60 = vector.load %arg2[%c0_8, %59, %c0_9, %c0_10] : memref<1x18x18x4xf32, #tpu.memory_space<vmem>>, vector<1x16x18x4xf32>
    %61 = vector.shape_cast %60 : vector<1x16x18x4xf32> to vector<16x18x4xf32>
    %62 = vector.extract_strided_slice %61 {offsets = [0, 0, 0], sizes = [16, 16, 4], strides = [1, 1, 1]} : vector<16x18x4xf32> to vector<16x16x4xf32>
    %63 = vector.shape_cast %16 : vector<4xf32> to vector<1x1x4xf32>
    %64 = vector.broadcast %63 : vector<1x1x4xf32> to vector<16x16x4xf32>
    %65 = arith.mulf %62, %64 : vector<16x16x4xf32>
    %66 = arith.addf %57, %65 : vector<16x16x4xf32>
    %67 = vector.extract_strided_slice %61 {offsets = [0, 1, 0], sizes = [16, 16, 4], strides = [1, 1, 1]} : vector<16x18x4xf32> to vector<16x16x4xf32>
    %68 = vector.shape_cast %18 : vector<4xf32> to vector<1x1x4xf32>
    %69 = vector.broadcast %68 : vector<1x1x4xf32> to vector<16x16x4xf32>
    %70 = arith.mulf %67, %69 : vector<16x16x4xf32>
    %71 = arith.addf %66, %70 : vector<16x16x4xf32>
    %72 = vector.extract_strided_slice %61 {offsets = [0, 2, 0], sizes = [16, 16, 4], strides = [1, 1, 1]} : vector<16x18x4xf32> to vector<16x16x4xf32>
    %73 = vector.shape_cast %20 : vector<4xf32> to vector<1x1x4xf32>
    %74 = vector.broadcast %73 : vector<1x1x4xf32> to vector<16x16x4xf32>
    %75 = arith.mulf %72, %74 : vector<16x16x4xf32>
    %76 = arith.addf %71, %75 : vector<16x16x4xf32>
    %77 = vector.shape_cast %76 : vector<16x16x4xf32> to vector<256x4xf32>
    %78 = arith.truncf %77 : vector<256x4xf32> to vector<256x4xbf16>
    %c0_11 = arith.constant 0 : index
    %c0_12 = arith.constant 0 : index
    %79 = vector.load %arg4[%c0_11, %c0_12] : memref<4x32xbf16, #tpu.memory_space<vmem>>, vector<4x32xbf16>
    %cst = arith.constant dense<0.000000e+00> : vector<256x32xf32>
    %80 = tpu.matmul %78, %79, %cst {dimension_numbers = #tpu.dot_dimension_numbers<[1], [0], [0], [1], [0, 0, 1, 1], [], []>} : vector<256x4xbf16>, vector<4x32xbf16>, vector<256x32xf32> -> vector<256x32xf32>
    %c0_13 = arith.constant 0 : index
    %c0_14 = arith.constant 0 : index
    %81 = vector.load %arg5[%c0_13, %c0_14] : memref<1x32xf32, #tpu.memory_space<vmem>>, vector<1x32xf32>
    %82 = vector.broadcast %81 : vector<1x32xf32> to vector<256x32xf32>
    %83 = arith.addf %80, %82 : vector<256x32xf32>
    %cst_15 = arith.constant 5.000000e-01 : f32
    %84 = vector.broadcast %cst_15 : f32 to vector<256x32xf32>
    %85 = arith.mulf %84, %83 : vector<256x32xf32>
    %86 = arith.mulf %83, %83 : vector<256x32xf32>
    %cst_16 = arith.constant 0.0356774069 : f32
    %87 = vector.broadcast %cst_16 : f32 to vector<256x32xf32>
    %88 = arith.mulf %87, %86 : vector<256x32xf32>
    %cst_17 = arith.constant 0.797884583 : f32
    %89 = vector.broadcast %cst_17 : f32 to vector<256x32xf32>
    %90 = arith.addf %89, %88 : vector<256x32xf32>
    %91 = arith.mulf %83, %90 : vector<256x32xf32>
    %92 = math.tanh %91 : vector<256x32xf32>
    %cst_18 = arith.constant 1.000000e+00 : f32
    %93 = vector.broadcast %cst_18 : f32 to vector<256x32xf32>
    %94 = arith.addf %93, %92 : vector<256x32xf32>
    %95 = arith.mulf %85, %94 : vector<256x32xf32>
    %96 = arith.truncf %95 : vector<256x32xf32> to vector<256x32xbf16>
    %c0_19 = arith.constant 0 : index
    %c0_20 = arith.constant 0 : index
    %97 = vector.load %arg6[%c0_19, %c0_20] : memref<32x4xbf16, #tpu.memory_space<vmem>>, vector<32x4xbf16>
    %cst_21 = arith.constant dense<0.000000e+00> : vector<256x4xf32>
    %98 = tpu.matmul %96, %97, %cst_21 {dimension_numbers = #tpu.dot_dimension_numbers<[1], [0], [0], [1], [0, 0, 1, 1], [], []>} : vector<256x32xbf16>, vector<32x4xbf16>, vector<256x4xf32> -> vector<256x4xf32>
    %c0_22 = arith.constant 0 : index
    %c0_23 = arith.constant 0 : index
    %99 = vector.load %arg7[%c0_22, %c0_23] : memref<1x4xf32, #tpu.memory_space<vmem>>, vector<1x4xf32>
    %100 = vector.broadcast %99 : vector<1x4xf32> to vector<256x4xf32>
    %101 = arith.addf %98, %100 : vector<256x4xf32>
    %102 = vector.shape_cast %101 : vector<256x4xf32> to vector<16x16x4xf32>
    %103 = arith.addf %48, %102 : vector<16x16x4xf32>
    %c0_24 = arith.constant 0 : index
    %c0_25 = arith.constant 0 : index
    %c0_26 = arith.constant 0 : index
    %c0_27 = arith.constant 0 : index
    %104 = vector.load %arg8[%c0_24, %c0_25, %c0_26, %c0_27] : memref<1x16x16x4xf32, #tpu.memory_space<vmem>>, vector<1x16x16x4xf32>
    %105 = vector.shape_cast %104 : vector<1x16x16x4xf32> to vector<16x16x4xf32>
    %106 = vector.shape_cast %103 : vector<16x16x4xf32> to vector<1x16x16x4xf32>
    tpu.vector_store %arg8[%c0_24, %c0_25, %c0_26, %c0_27], %106 {strides = array<i32>} : memref<1x16x16x4xf32, #tpu.memory_space<vmem>>, vector<1x16x16x4xf32>,
    return
  }
  func.func @transform_0(%arg0: i32, %arg1: i32) -> (i32, i32, i32, i32) {
    %c0_i32 = arith.constant 0 : i32
    %c0_i32_0 = arith.constant 0 : i32
    %c0_i32_1 = arith.constant 0 : i32
    %c0_i32_2 = arith.constant 0 : i32
    return %arg0, %c0_i32, %c0_i32_0, %c0_i32_1 : i32, i32, i32, i32
  }
  func.func @transform_1(%arg0: i32, %arg1: i32) -> (i32, i32, i32) {
    %c0_i32 = arith.constant 0 : i32
    %c0_i32_0 = arith.constant 0 : i32
    %c0_i32_1 = arith.constant 0 : i32
    %c0_i32_2 = arith.constant 0 : i32
    return %c0_i32, %c0_i32_0, %c0_i32_1 : i32, i32, i32
  }
  func.func @transform_2(%arg0: i32, %arg1: i32) -> (i32, i32) {
    %c0_i32 = arith.constant 0 : i32
    %c0_i32_0 = arith.constant 0 : i32
    %c0_i32_1 = arith.constant 0 : i32
    return %c0_i32, %c0_i32_0 : i32, i32
  }
  func.func @transform_3(%arg0: i32, %arg1: i32) -> (i32, i32) {
    %c0_i32 = arith.constant 0 : i32
    %c0_i32_0 = arith.constant 0 : i32
    %c0_i32_1 = arith.constant 0 : i32
    return %c0_i32, %c0_i32_0 : i32, i32
  }
  func.func @transform_4(%arg0: i32, %arg1: i32) -> (i32, i32) {
    %c0_i32 = arith.constant 0 : i32
    %c0_i32_0 = arith.constant 0 : i32
    %c0_i32_1 = arith.constant 0 : i32
    return %c0_i32, %c0_i32_0 : i32, i32
  }
  func.func @transform_5(%arg0: i32, %arg1: i32) -> (i32, i32) {
    %c0_i32 = arith.constant 0 : i32
    %c0_i32_0 = arith.constant 0 : i32
    %c0_i32_1 = arith.constant 0 : i32
    return %c0_i32, %c0_i32_0 : i32, i32
  }
  func.func @transform_6(%arg0: i32, %arg1: i32) -> (i32, i32, i32, i32) {
    %c0_i32 = arith.constant 0 : i32
    %c0_i32_0 = arith.constant 0 : i32
    %c0_i32_1 = arith.constant 0 : i32
    return %arg0, %arg1, %c0_i32, %c0_i32_0 : i32, i32, i32, i32
  }
}

</mosaic_0001>

<llo_original>
// kernel: tpu_custom_call.1
$region0: #{tpu_custom_call.1}
  #allocation0 [shape = 'u32[]', space=smem, size = 0x4, offset = 0x4, fixed_abs, tag = 'smem constant byte address 0x4 - core index']
  #allocation1 [shape = 'u32[144,128]{1,0:T(1,128)}', space=vmem, size = 0x12000, scoped, tag = 'internal scratch']
  %s0 = inlined_call_operand.vmem [shape: f32[2,18,18,4], index: 0, kind: input, shape index: {}]
  %s1 = inlined_call_operand.vmem [shape: f32[3,3,4], index: 1, kind: input, shape index: {}]
  %s2 = inlined_call_operand.vmem [shape: bf16[4,32], index: 2, kind: input, shape index: {}]
  %s3 = inlined_call_operand.vmem [shape: f32[1,32], index: 3, kind: input, shape index: {}]
  %s4 = inlined_call_operand.vmem [shape: bf16[32,4], index: 4, kind: input, shape index: {}]
  %s5 = inlined_call_operand.vmem [shape: f32[1,4], index: 5, kind: input, shape index: {}]
  %s6 = inlined_call_operand.vmem [shape: f32[2,16,16,4], index: 6, kind: output, shape index: {}]
  %s7 = sld [smem:[#allocation0]]
  $region57: #{tpu_custom_call.1} parent=0
    _
  %s9 = ssub.s32 1, %s7
  %s10 = scalar_select 0, %s9, %s7
  loop: start=0, step=1, limit=4
  $region2: #{tpu_custom_call.1} parent=0 // loop_pre_header
    _
  $region3: #{tpu_custom_call.1} parent=0 // loop_header
    %s12 = sphi 0, %s16
    %p13 = scmp.ge.s32.totalorder %s12, 4
    %s19 = sphi 0, %s31
    %s20 = sphi 0, %s27
    %s21 = sphi 0, %s19
    %s22 = sphi 0, %s20
    %s23 = sphi 0, %s21
    %s24 = sphi 0, %s22
    %s34 = sphi 0, %s36
    %s37 = sphi 0, %s34
    %s38 = sphi 0, %s37
    %s54 = sphi 0, %s38
    %s58 = sphi 0, %s58
    %s60 = sphi 0, %s58
    %s61 = sphi 0, %s60
    %s75 = sphi 0, %s61
    %s79 = sphi 0, %s79
    %s81 = sphi 0, %s79
    %s82 = sphi 0, %s81
    %s96 = sphi 0, %s82
    %s100 = sphi 0, %s100
    %s102 = sphi 0, %s100
    %s103 = sphi 0, %s102
    %s117 = sphi 0, %s103
    %s121 = sphi 0, %s121
    %s123 = sphi 0, %s121
    %s124 = sphi 0, %s123
    %s138 = sphi 0, %s124
    %s142 = sphi 0, %s142
    %s144 = sphi 0, %s142
    %s145 = sphi 0, %s144
    %s159 = sphi 0, %s145
    %s167 = sphi 0, %s169
    %s170 = sphi 0, %s167
    %s171 = sphi 0, %s170
    %s187 = sphi 0, %s171
  $region4: #{tpu_custom_call.1} parent=0 // loop_header_branch
    %15 = sbr.rel (%p13) target = $region8
  $region5: #{tpu_custom_call.1} parent=0 // loop_body
    %s17 = ssub.s32 %s12, 1
    %s18 = ssub.s32 %s12, 2
    %s25 = sadd.s32 1, %s20
    %p26 = scmp.ge.s32.totalorder %s25, 1
    %s27 = scalar_select %p26, 0, %s25
    %s28 = sadd.s32 1, %s19
    %s29 = scalar_select %p26, %s28, %s19
    %p30 = scmp.ge.s32.totalorder %s29, 2
    %s31 = scalar_select %p30, 0, %s29
    %s32 = ssub.s32 %s19, %s31
    %p33 = scmp.eq.s32.totalorder %s32, 0
    %s35 = sadd.s32 %s34, 1
    %s36 = scalar_select %p33, %s34, %s35
    %p39 = pneg %p33
    %p40 = scmp.eq.s32.totalorder %s12, 1
    %p41 = por %p39, %p40
    %p42 = scmp.ne.s32.totalorder %s34, %s37
    %p43 = scmp.eq.s32.totalorder %s12, 0
    %p44 = por %p42, %p43
    %p45 = scmp.ne.s32.totalorder %s34, %s37
    %p46 = scmp.eq.s32.totalorder %s17, 1
    %p47 = por %p45, %p46
    %p48 = scmp.ne.s32.totalorder %s37, %s38
    %p49 = scmp.eq.s32.totalorder %s17, 0
    %p50 = por %p48, %p49
    %p51 = scmp.ne.s32.totalorder %s37, %s38
    %p52 = scmp.eq.s32.totalorder %s18, 1
    %p53 = por %p51, %p52
    %p55 = scmp.ne.s32.totalorder %s38, %s54
    %p56 = scmp.eq.s32.totalorder %s18, 0
    %p57 = por %p55, %p56
    %s59 = sadd.s32 %s58, 1
    %p62 = scmp.eq.s32.totalorder %s12, 1
    %p63 = scmp.ne.s32.totalorder %s58, %s60
    %p64 = scmp.eq.s32.totalorder %s12, 0
    %p65 = por %p63, %p64
    %p66 = scmp.ne.s32.totalorder %s58, %s60
    %p67 = scmp.eq.s32.totalorder %s17, 1
    %p68 = por %p66, %p67
    %p69 = scmp.ne.s32.totalorder %s60, %s61
    %p70 = scmp.eq.s32.totalorder %s17, 0
    %p71 = por %p69, %p70
    %p72 = scmp.ne.s32.totalorder %s60, %s61
    %p73 = scmp.eq.s32.totalorder %s18, 1
    %p74 = por %p72, %p73
    %p76 = scmp.ne.s32.totalorder %s61, %s75
    %p77 = scmp.eq.s32.totalorder %s18, 0
    %p78 = por %p76, %p77
    %s80 = sadd.s32 %s79, 1
    %p83 = scmp.eq.s32.totalorder %s12, 1
    %p84 = scmp.ne.s32.totalorder %s79, %s81
    %p85 = scmp.eq.s32.totalorder %s12, 0
    %p86 = por %p84, %p85
    %p87 = scmp.ne.s32.totalorder %s79, %s81
    %p88 = scmp.eq.s32.totalorder %s17, 1
    %p89 = por %p87, %p88
    %p90 = scmp.ne.s32.totalorder %s81, %s82
    %p91 = scmp.eq.s32.totalorder %s17, 0
    %p92 = por %p90, %p91
    %p93 = scmp.ne.s32.totalorder %s81, %s82
    %p94 = scmp.eq.s32.totalorder %s18, 1
    %p95 = por %p93, %p94
    %p97 = scmp.ne.s32.totalorder %s82, %s96
    %p98 = scmp.eq.s32.totalorder %s18, 0
    %p99 = por %p97, %p98
    %s101 = sadd.s32 %s100, 1
    %p104 = scmp.eq.s32.totalorder %s12, 1
    %p105 = scmp.ne.s32.totalorder %s100, %s102
    %p106 = scmp.eq.s32.totalorder %s12, 0
    %p107 = por %p105, %p106
    %p108 = scmp.ne.s32.totalorder %s100, %s102
    %p109 = scmp.eq.s32.totalorder %s17, 1
    %p110 = por %p108, %p109
    %p111 = scmp.ne.s32.totalorder %s102, %s103
    %p112 = scmp.eq.s32.totalorder %s17, 0
    %p113 = por %p111, %p112
    %p114 = scmp.ne.s32.totalorder %s102, %s103
    %p115 = scmp.eq.s32.totalorder %s18, 1
    %p116 = por %p114, %p115
    %p118 = scmp.ne.s32.totalorder %s103, %s117
    %p119 = scmp.eq.s32.totalorder %s18, 0
    %p120 = por %p118, %p119
    %s122 = sadd.s32 %s121, 1
    %p125 = scmp.eq.s32.totalorder %s12, 1
    %p126 = scmp.ne.s32.totalorder %s121, %s123
    %p127 = scmp.eq.s32.totalorder %s12, 0
    %p128 = por %p126, %p127
    %p129 = scmp.ne.s32.totalorder %s121, %s123
    %p130 = scmp.eq.s32.totalorder %s17, 1
    %p131 = por %p129, %p130
    %p132 = scmp.ne.s32.totalorder %s123, %s124
    %p133 = scmp.eq.s32.totalorder %s17, 0
    %p134 = por %p132, %p133
    %p135 = scmp.ne.s32.totalorder %s123, %s124
    %p136 = scmp.eq.s32.totalorder %s18, 1
    %p137 = por %p135, %p136
    %p139 = scmp.ne.s32.totalorder %s124, %s138
    %p140 = scmp.eq.s32.totalorder %s18, 0
    %p141 = por %p139, %p140
    %s143 = sadd.s32 %s142, 1
    %p146 = scmp.eq.s32.totalorder %s12, 1
    %p147 = scmp.ne.s32.totalorder %s142, %s144
    %p148 = scmp.eq.s32.totalorder %s12, 0
    %p149 = por %p147, %p148
    %p150 = scmp.ne.s32.totalorder %s142, %s144
    %p151 = scmp.eq.s32.totalorder %s17, 1
    %p152 = por %p150, %p151
    %p153 = scmp.ne.s32.totalorder %s144, %s145
    %p154 = scmp.eq.s32.totalorder %s17, 0
    %p155 = por %p153, %p154
    %p156 = scmp.ne.s32.totalorder %s144, %s145
    %p157 = scmp.eq.s32.totalorder %s18, 1
    %p158 = por %p156, %p157
    %p160 = scmp.ne.s32.totalorder %s145, %s159
    %p161 = scmp.eq.s32.totalorder %s18, 0
    %p162 = por %p160, %p161
    %s163 = ssub.s32 %s19, %s31
    %s164 = ssub.s32 %s20, %s27
    %s165 = sor.u32 %s163, %s164
    %p166 = scmp.eq.s32.totalorder %s165, 0
    %s168 = sadd.s32 %s167, 1
    %s169 = scalar_select %p166, %s167, %s168
    %p172 = pneg %p166
    %p173 = scmp.eq.s32.totalorder %s12, 1
    %p174 = por %p172, %p173
    %p175 = scmp.ne.s32.totalorder %s167, %s170
    %p176 = scmp.eq.s32.totalorder %s12, 0
    %p177 = por %p175, %p176
    %p178 = scmp.ne.s32.totalorder %s167, %s170
    %p179 = scmp.eq.s32.totalorder %s17, 1
    %p180 = por %p178, %p179
    %p181 = scmp.ne.s32.totalorder %s170, %s171
    %p182 = scmp.eq.s32.totalorder %s17, 0
    %p183 = por %p181, %p182
    %p184 = scmp.ne.s32.totalorder %s170, %s171
    %p185 = scmp.eq.s32.totalorder %s18, 1
    %p186 = por %p184, %p185
    %p188 = scmp.ne.s32.totalorder %s171, %s187
    %p189 = scmp.eq.s32.totalorder %s18, 0
    %p190 = por %p188, %p189
    %p191 = scmp.le.s32.totalorder 1, %s12
    %p192 = scmp.lt.s32.totalorder %s12, 3
    %p193 = pnand %p191, %p192
    %p194 = pneg %p193
    // Predicated region
    $region9: #{tpu_custom_call.1} parent=5 // pred_check
      _
    $region10: #{tpu_custom_call.1} parent=5 // pred_check_branch
      %196 = sbr.rel (%p193) target = $region12
    $region11: #{tpu_custom_call.1} parent=5 // pred_region
      %s197 = ssub.s32 %s12, 1
      // Predicated region
      $region13: #{tpu_custom_call.1} parent=11 // pred_check
        %p198 = pneg %p71
      $region14: #{tpu_custom_call.1} parent=11 // pred_check_branch
        %200 = sbr.rel (%p198) target = $region16
      $region15: #{tpu_custom_call.1} parent=11 // pred_region
        _
      $region16: #{tpu_custom_call.1} parent=11 // pred_fallthru
        _
      // Predicated region
      $region17: #{tpu_custom_call.1} parent=11 // pred_check
        %p201 = pneg %p92
      $region18: #{tpu_custom_call.1} parent=11 // pred_check_branch
        %203 = sbr.rel (%p201) target = $region20
      $region19: #{tpu_custom_call.1} parent=11 // pred_region
        _
      $region20: #{tpu_custom_call.1} parent=11 // pred_fallthru
        _
      // Predicated region
      $region21: #{tpu_custom_call.1} parent=11 // pred_check
        %p204 = pneg %p113
      $region22: #{tpu_custom_call.1} parent=11 // pred_check_branch
        %206 = sbr.rel (%p204) target = $region24
      $region23: #{tpu_custom_call.1} parent=11 // pred_region
        _
      $region24: #{tpu_custom_call.1} parent=11 // pred_fallthru
        _
      // Predicated region
      $region25: #{tpu_custom_call.1} parent=11 // pred_check
        %p207 = pneg %p134
      $region26: #{tpu_custom_call.1} parent=11 // pred_check_branch
        %209 = sbr.rel (%p207) target = $region28
      $region27: #{tpu_custom_call.1} parent=11 // pred_region
        _
      $region28: #{tpu_custom_call.1} parent=11 // pred_fallthru
        _
      // Predicated region
      $region29: #{tpu_custom_call.1} parent=11 // pred_check
        %p210 = pneg %p155
      $region30: #{tpu_custom_call.1} parent=11 // pred_check_branch
        %212 = sbr.rel (%p210) target = $region32
      $region31: #{tpu_custom_call.1} parent=11 // pred_region
        _
      $region32: #{tpu_custom_call.1} parent=11 // pred_fallthru
        _
    $region12: #{tpu_custom_call.1} parent=5 // pred_fallthru
      _
    %p213 = scmp.lt.s32.totalorder %s12, 2
    // Predicated region
    $region33: #{tpu_custom_call.1} parent=5 // pred_check
      %p214 = pneg %p213
    $region34: #{tpu_custom_call.1} parent=5 // pred_check_branch
      %216 = sbr.rel (%p214) target = $region36
    $region35: #{tpu_custom_call.1} parent=5 // pred_region
      // Predicated region
      $region37: #{tpu_custom_call.1} parent=35 // pred_check
        %p217 = pneg %p44
      $region38: #{tpu_custom_call.1} parent=35 // pred_check_branch
        %219 = sbr.rel (%p217) target = $region40
      $region39: #{tpu_custom_call.1} parent=35 // pred_region
        %p220 = scmp.lt.s32.totalorder %s19, 1
        %s221 = scalar_select %p220, %s19, 1
        %s222 = smul.addr %s221, 54
        %s223 = smul.addr %s222, 8
        %s224 = scalar_lea.vmem %s0, %s223
      $region40: #{tpu_custom_call.1} parent=35 // pred_fallthru
        _
    $region36: #{tpu_custom_call.1} parent=5 // pred_fallthru
      _
    %p225 = scmp.le.s32.totalorder 1, %s12
    %p226 = scmp.lt.s32.totalorder %s12, 3
    %p227 = pnand %p225, %p226
    %p228 = pneg %p227
    // Predicated region
    $region41: #{tpu_custom_call.1} parent=5 // pred_check
      _
    $region42: #{tpu_custom_call.1} parent=5 // pred_check_branch
      %230 = sbr.rel (%p227) target = $region44
    $region43: #{tpu_custom_call.1} parent=5 // pred_region
      %s231 = ssub.s32 %s12, 1
      %p232 = scmp.lt.s32.totalorder %s21, 1
      %s233 = scalar_select %p232, %s21, 1
      %s234 = smul.addr %s233, 54
      %s235 = smul.addr %s234, 8
      %s236 = scalar_lea.vmem %s0, %s235
      %p237 = pneg %p50
      %p238 = pneg %p47
      %p239 = pneg %p71
      %p240 = pneg %p68
      %p241 = pneg %p92
      %p242 = pneg %p89
      %p243 = pneg %p113
      %p244 = pneg %p110
      %p245 = pneg %p134
      %p246 = pneg %p131
      %p247 = pneg %p155
      %p248 = pneg %p152
      %p249 = pneg %p183
      %p250 = pneg %p180
      %s251 = smul.u32 16, %s22
      %p252 = scmp.lt.s32.totalorder %s21, 1
      %s253 = scalar_select %p252, %s21, 1
      %p254 = scmp.lt.s32.totalorder %s251, 15
      %s255 = scalar_select %p254, %s251, 15
      %s256 = smul.addr %s255, 2
      %s257 = smul.addr %s253, 32
      %s258 = sadd.s32 %s256, %s257
      %s259 = smul.addr %s258, 8
      %s260 = scalar_lea.vmem %s6, %s259
      %p261 = scmp.lt.s32.totalorder %s21, 1
      %s262 = scalar_select %p261, %s21, 1
      %s263 = smul.addr %s262, 54
      %s264 = smul.addr %s263, 8
      %s265 = scalar_lea.vmem %s0, %s264
      %s266 = smul.u32 16, %s22
      %p267 = scmp.lt.s32.totalorder %s21, 1
      %s268 = scalar_select %p267, %s21, 1
      %p269 = scmp.lt.s32.totalorder %s266, 15
      %s270 = scalar_select %p269, %s266, 15
      %s271 = smul.addr %s270, 2
      %s272 = smul.addr %s268, 32
      %s273 = sadd.s32 %s271, %s272
      %s274 = smul.addr %s273, 8
      %s275 = scalar_lea.vmem %s6, %s274
      %s276 = smul.u32 16, %s22
      %s278 = smul.u32 %s22, 16
      %v279 = vld [vmem:[%s1] sm:$0x7]
      %v280 = vld [vmem:[%s1 + $0x4] sm:$0x7]
      %v281 = vld [vmem:[%s1 + $0x8] sm:$0x7]
      %s282 = smul.u32 %s278, 24
      %s283 = scalar_lea.vmem %s265, %s282
      %v284 = vld [vmem:[%s283] sm:$0xff]
      %v285 = vld [vmem:[%s283 + $0x8] sm:$0xff]
      %v286 = vld [vmem:[%s283 + $0x10] sm:$0x3]
      %v287 = vld [vmem:[%s283 + $0x18] sm:$0xff]
      %v288 = vld [vmem:[%s283 + $0x20] sm:$0xff]
      %v289 = vld [vmem:[%s283 + $0x28] sm:$0x3]
      %v290 = vld [vmem:[%s283 + $0x30] sm:$0xff]
      %v291 = vld [vmem:[%s283 + $0x38] sm:$0xff]
      %v292 = vld [vmem:[%s283 + $0x40] sm:$0x3]
      %v293 = vld [vmem:[%s283 + $0x48] sm:$0xff]
      %v294 = vld [vmem:[%s283 + $0x50] sm:$0xff]
      %v295 = vld [vmem:[%s283 + $0x58] sm:$0x3]
      %v296 = vld [vmem:[%s283 + $0x60] sm:$0xff]
      %v297 = vld [vmem:[%s283 + $0x68] sm:$0xff]
      %v298 = vld [vmem:[%s283 + $0x70] sm:$0x3]
      %v299 = vld [vmem:[%s283 + $0x78] sm:$0xff]
      %v300 = vld [vmem:[%s283 + $0x80] sm:$0xff]
      %v301 = vld [vmem:[%s283 + $0x88] sm:$0x3]
      %v302 = vld [vmem:[%s283 + $0x90] sm:$0xff]
      %v303 = vld [vmem:[%s283 + $0x98] sm:$0xff]
      %v304 = vld [vmem:[%s283 + $0xa0] sm:$0x3]
      %v305 = vld [vmem:[%s283 + $0xa8] sm:$0xff]
      %v306 = vld [vmem:[%s283 + $0xb0] sm:$0xff]
      %v307 = vld [vmem:[%s283 + $0xb8] sm:$0x3]
      %v308 = vld [vmem:[%s283 + $0xc0] sm:$0xff]
      %v309 = vld [vmem:[%s283 + $0xc8] sm:$0xff]
      %v310 = vld [vmem:[%s283 + $0xd0] sm:$0x3]
      %v311 = vld [vmem:[%s283 + $0xd8] sm:$0xff]
      %v312 = vld [vmem:[%s283 + $0xe0] sm:$0xff]
      %v313 = vld [vmem:[%s283 + $0xe8] sm:$0x3]
      %v314 = vld [vmem:[%s283 + $0xf0] sm:$0xff]
      %v315 = vld [vmem:[%s283 + $0xf8] sm:$0xff]
      %v316 = vld [vmem:[%s283 + $0x100] sm:$0x3]
      %v317 = vld [vmem:[%s283 + $0x108] sm:$0xff]
      %v318 = vld [vmem:[%s283 + $0x110] sm:$0xff]
      %v319 = vld [vmem:[%s283 + $0x118] sm:$0x3]
      %v320 = vld [vmem:[%s283 + $0x120] sm:$0xff]
      %v321 = vld [vmem:[%s283 + $0x128] sm:$0xff]
      %v322 = vld [vmem:[%s283 + $0x130] sm:$0x3]
      %v323 = vld [vmem:[%s283 + $0x138] sm:$0xff]
      %v324 = vld [vmem:[%s283 + $0x140] sm:$0xff]
      %v325 = vld [vmem:[%s283 + $0x148] sm:$0x3]
      %v326 = vld [vmem:[%s283 + $0x150] sm:$0xff]
      %v327 = vld [vmem:[%s283 + $0x158] sm:$0xff]
      %v328 = vld [vmem:[%s283 + $0x160] sm:$0x3]
      %v329 = vld [vmem:[%s283 + $0x168] sm:$0xff]
      %v330 = vld [vmem:[%s283 + $0x170] sm:$0xff]
      %v331 = vld [vmem:[%s283 + $0x178] sm:$0x3]
      %v332 = vlaneseq
      %v333 = vshrl.u32 %v332, 7
      %v334 = vsub.s32 0, %v333
      %v335 = vrot.slane %v279, %v334
      %v336 = vmul.f32 %v284, %v335
      %v337 = vmul.f32 %v285, %v335
      %v338 = vmul.f32 %v287, %v335
      %v339 = vmul.f32 %v288, %v335
      %v340 = vmul.f32 %v290, %v335
      %v341 = vmul.f32 %v291, %v335
      %v342 = vmul.f32 %v293, %v335
      %v343 = vmul.f32 %v294, %v335
      %v344 = vmul.f32 %v296, %v335
      %v345 = vmul.f32 %v297, %v335
      %v346 = vmul.f32 %v299, %v335
      %v347 = vmul.f32 %v300, %v335
      %v348 = vmul.f32 %v302, %v335
      %v349 = vmul.f32 %v303, %v335
      %v350 = vmul.f32 %v305, %v335
      %v351 = vmul.f32 %v306, %v335
      %v352 = vmul.f32 %v308, %v335
      %v353 = vmul.f32 %v309, %v335
      %v354 = vmul.f32 %v311, %v335
      %v355 = vmul.f32 %v312, %v335
      %v356 = vmul.f32 %v314, %v335
      %v357 = vmul.f32 %v315, %v335
      %v358 = vmul.f32 %v317, %v335
      %v359 = vmul.f32 %v318, %v335
      %v360 = vmul.f32 %v320, %v335
      %v361 = vmul.f32 %v321, %v335
      %v362 = vmul.f32 %v323, %v335
      %v363 = vmul.f32 %v324, %v335
      %v364 = vmul.f32 %v326, %v335
      %v365 = vmul.f32 %v327, %v335
      %v366 = vmul.f32 %v329, %v335
      %v367 = vmul.f32 %v330, %v335
      %v368 = vlaneseq
      %v369 = vshrl.u32 %v368, 7
      %v370 = vsub.s32 1, %v369
      %v371 = vrot.slane %v279, %v370
      %v372 = vmul.f32 %v284, %v371
      %v373 = vmul.f32 %v285, %v371
      %v374 = vmul.f32 %v286, %v371
      %v375 = vmul.f32 %v287, %v371
      %v376 = vmul.f32 %v288, %v371
      %v377 = vmul.f32 %v289, %v371
      %v378 = vmul.f32 %v290, %v371
      %v379 = vmul.f32 %v291, %v371
      %v380 = vmul.f32 %v292, %v371
      %v381 = vmul.f32 %v293, %v371
      %v382 = vmul.f32 %v294, %v371
      %v383 = vmul.f32 %v295, %v371
      %v384 = vmul.f32 %v296, %v371
      %v385 = vmul.f32 %v297, %v371
      %v386 = vmul.f32 %v298, %v371
      %v387 = vmul.f32 %v299, %v371
      %v388 = vmul.f32 %v300, %v371
      %v389 = vmul.f32 %v301, %v371
      %v390 = vmul.f32 %v302, %v371
      %v391 = vmul.f32 %v303, %v371
      %v392 = vmul.f32 %v304, %v371
      %v393 = vmul.f32 %v305, %v371
      %v394 = vmul.f32 %v306, %v371
      %v395 = vmul.f32 %v307, %v371
      %v396 = vmul.f32 %v308, %v371
      %v397 = vmul.f32 %v309, %v371
      %v398 = vmul.f32 %v310, %v371
      %v399 = vmul.f32 %v311, %v371
      %v400 = vmul.f32 %v312, %v371
      %v401 = vmul.f32 %v313, %v371
      %v402 = vmul.f32 %v314, %v371
      %v403 = vmul.f32 %v315, %v371
      %v404 = vmul.f32 %v316, %v371
      %v405 = vmul.f32 %v317, %v371
      %v406 = vmul.f32 %v318, %v371
      %v407 = vmul.f32 %v319, %v371
      %v408 = vmul.f32 %v320, %v371
      %v409 = vmul.f32 %v321, %v371
      %v410 = vmul.f32 %v322, %v371
      %v411 = vmul.f32 %v323, %v371
      %v412 = vmul.f32 %v324, %v371
      %v413 = vmul.f32 %v325, %v371
      %v414 = vmul.f32 %v326, %v371
      %v415 = vmul.f32 %v327, %v371
      %v416 = vmul.f32 %v328, %v371
      %v417 = vmul.f32 %v329, %v371
      %v418 = vmul.f32 %v330, %v371
      %v419 = vmul.f32 %v331, %v371
      %vm468 = vcmask 1046528
      %v469 = vrot.slane %v372, 1
      %v470 = vrot.slane %v373, 1
      %v471 = vsel %vm468, %v469, %v470
      %v472 = vrot.slane %v374, 1
      %v473 = vsel %vm468, %v470, %v472
      %v474 = vrot.slane %v375, 1
      %v475 = vrot.slane %v376, 1
      %v476 = vsel %vm468, %v474, %v475
      %v477 = vrot.slane %v377, 1
      %v478 = vsel %vm468, %v475, %v477
      %v479 = vrot.slane %v378, 1
      %v480 = vrot.slane %v379, 1
      %v481 = vsel %vm468, %v479, %v480
      %v482 = vrot.slane %v380, 1
      %v483 = vsel %vm468, %v480, %v482
      %v484 = vrot.slane %v381, 1
      %v485 = vrot.slane %v382, 1
      %v486 = vsel %vm468, %v484, %v485
      %v487 = vrot.slane %v383, 1
      %v488 = vsel %vm468, %v485, %v487
      %v489 = vrot.slane %v384, 1
      %v490 = vrot.slane %v385, 1
      %v491 = vsel %vm468, %v489, %v490
      %v492 = vrot.slane %v386, 1
      %v493 = vsel %vm468, %v490, %v492
      %v494 = vrot.slane %v387, 1
      %v495 = vrot.slane %v388, 1
      %v496 = vsel %vm468, %v494, %v495
      %v497 = vrot.slane %v389, 1
      %v498 = vsel %vm468, %v495, %v497
      %v499 = vrot.slane %v390, 1
      %v500 = vrot.slane %v391, 1
      %v501 = vsel %vm468, %v499, %v500
      %v502 = vrot.slane %v392, 1
      %v503 = vsel %vm468, %v500, %v502
      %v504 = vrot.slane %v393, 1
      %v505 = vrot.slane %v394, 1
      %v506 = vsel %vm468, %v504, %v505
      %v507 = vrot.slane %v395, 1
      %v508 = vsel %vm468, %v505, %v507
      %v509 = vrot.slane %v396, 1
      %v510 = vrot.slane %v397, 1
      %v511 = vsel %vm468, %v509, %v510
      %v512 = vrot.slane %v398, 1
      %v513 = vsel %vm468, %v510, %v512
      %v514 = vrot.slane %v399, 1
      %v515 = vrot.slane %v400, 1
      %v516 = vsel %vm468, %v514, %v515
      %v517 = vrot.slane %v401, 1
      %v518 = vsel %vm468, %v515, %v517
      %v519 = vrot.slane %v402, 1
      %v520 = vrot.slane %v403, 1
      %v521 = vsel %vm468, %v519, %v520
      %v522 = vrot.slane %v404, 1
      %v523 = vsel %vm468, %v520, %v522
      %v524 = vrot.slane %v405, 1
      %v525 = vrot.slane %v406, 1
      %v526 = vsel %vm468, %v524, %v525
      %v527 = vrot.slane %v407, 1
      %v528 = vsel %vm468, %v525, %v527
      %v529 = vrot.slane %v408, 1
      %v530 = vrot.slane %v409, 1
      %v531 = vsel %vm468, %v529, %v530
      %v532 = vrot.slane %v410, 1
      %v533 = vsel %vm468, %v530, %v532
      %v534 = vrot.slane %v411, 1
      %v535 = vrot.slane %v412, 1
      %v536 = vsel %vm468, %v534, %v535
      %v537 = vrot.slane %v413, 1
      %v538 = vsel %vm468, %v535, %v537
      %v539 = vrot.slane %v414, 1
      %v540 = vrot.slane %v415, 1
      %v541 = vsel %vm468, %v539, %v540
      %v542 = vrot.slane %v416, 1
      %v543 = vsel %vm468, %v540, %v542
      %v544 = vrot.slane %v417, 1
      %v545 = vrot.slane %v418, 1
      %v546 = vsel %vm468, %v544, %v545
      %v547 = vrot.slane %v419, 1
      %v548 = vsel %vm468, %v545, %v547
      %v581 = vadd.f32 %v336, %v471
      %v582 = vadd.f32 %v337, %v473
      %v583 = vadd.f32 %v338, %v476
      %v584 = vadd.f32 %v339, %v478
      %v585 = vadd.f32 %v340, %v481
      %v586 = vadd.f32 %v341, %v483
      %v587 = vadd.f32 %v342, %v486
      %v588 = vadd.f32 %v343, %v488
      %v589 = vadd.f32 %v344, %v491
      %v590 = vadd.f32 %v345, %v493
      %v591 = vadd.f32 %v346, %v496
      %v592 = vadd.f32 %v347, %v498
      %v593 = vadd.f32 %v348, %v501
      %v594 = vadd.f32 %v349, %v503
      %v595 = vadd.f32 %v350, %v506
      %v596 = vadd.f32 %v351, %v508
      %v597 = vadd.f32 %v352, %v511
      %v598 = vadd.f32 %v353, %v513
      %v599 = vadd.f32 %v354, %v516
      %v600 = vadd.f32 %v355, %v518
      %v601 = vadd.f32 %v356, %v521
      %v602 = vadd.f32 %v357, %v523
      %v603 = vadd.f32 %v358, %v526
      %v604 = vadd.f32 %v359, %v528
      %v605 = vadd.f32 %v360, %v531
      %v606 = vadd.f32 %v361, %v533
      %v607 = vadd.f32 %v362, %v536
      %v608 = vadd.f32 %v363, %v538
      %v609 = vadd.f32 %v364, %v541
      %v610 = vadd.f32 %v365, %v543
      %v611 = vadd.f32 %v366, %v546
      %v612 = vadd.f32 %v367, %v548
      %v613 = vlaneseq
      %v614 = vshrl.u32 %v613, 7
      %v615 = vsub.s32 2, %v614
      %v616 = vrot.slane %v279, %v615
      %v617 = vmul.f32 %v284, %v616
      %v618 = vmul.f32 %v285, %v616
      %v619 = vmul.f32 %v286, %v616
      %v620 = vmul.f32 %v287, %v616
      %v621 = vmul.f32 %v288, %v616
      %v622 = vmul.f32 %v289, %v616
      %v623 = vmul.f32 %v290, %v616
      %v624 = vmul.f32 %v291, %v616
      %v625 = vmul.f32 %v292, %v616
      %v626 = vmul.f32 %v293, %v616
      %v627 = vmul.f32 %v294, %v616
      %v628 = vmul.f32 %v295, %v616
      %v629 = vmul.f32 %v296, %v616
      %v630 = vmul.f32 %v297, %v616
      %v631 = vmul.f32 %v298, %v616
      %v632 = vmul.f32 %v299, %v616
      %v633 = vmul.f32 %v300, %v616
      %v634 = vmul.f32 %v301, %v616
      %v635 = vmul.f32 %v302, %v616
      %v636 = vmul.f32 %v303, %v616
      %v637 = vmul.f32 %v304, %v616
      %v638 = vmul.f32 %v305, %v616
      %v639 = vmul.f32 %v306, %v616
      %v640 = vmul.f32 %v307, %v616
      %v641 = vmul.f32 %v308, %v616
      %v642 = vmul.f32 %v309, %v616
      %v643 = vmul.f32 %v310, %v616
      %v644 = vmul.f32 %v311, %v616
      %v645 = vmul.f32 %v312, %v616
      %v646 = vmul.f32 %v313, %v616
      %v647 = vmul.f32 %v314, %v616
      %v648 = vmul.f32 %v315, %v616
      %v649 = vmul.f32 %v316, %v616
      %v650 = vmul.f32 %v317, %v616
      %v651 = vmul.f32 %v318, %v616
      %v652 = vmul.f32 %v319, %v616
      %v653 = vmul.f32 %v320, %v616
      %v654 = vmul.f32 %v321, %v616
      %v655 = vmul.f32 %v322, %v616
      %v656 = vmul.f32 %v323, %v616
      %v657 = vmul.f32 %v324, %v616
      %v658 = vmul.f32 %v325, %v616
      %v659 = vmul.f32 %v326, %v616
      %v660 = vmul.f32 %v327, %v616
      %v661 = vmul.f32 %v328, %v616
      %v662 = vmul.f32 %v329, %v616
      %v663 = vmul.f32 %v330, %v616
      %v664 = vmul.f32 %v331, %v616
      %vm713 = vcmask 1045504
      %v714 = vrot.slane %v617, 2
      %v715 = vrot.slane %v618, 2
      %v716 = vsel %vm713, %v714, %v715
      %v717 = vrot.slane %v619, 2
      %v718 = vsel %vm713, %v715, %v717
      %v719 = vrot.slane %v620, 2
      %v720 = vrot.slane %v621, 2
      %v721 = vsel %vm713, %v719, %v720
      %v722 = vrot.slane %v622, 2
      %v723 = vsel %vm713, %v720, %v722
      %v724 = vrot.slane %v623, 2
      %v725 = vrot.slane %v624, 2
      %v726 = vsel %vm713, %v724, %v725
      %v727 = vrot.slane %v625, 2
      %v728 = vsel %vm713, %v725, %v727
      %v729 = vrot.slane %v626, 2
      %v730 = vrot.slane %v627, 2
      %v731 = vsel %vm713, %v729, %v730
      %v732 = vrot.slane %v628, 2
      %v733 = vsel %vm713, %v730, %v732
      %v734 = vrot.slane %v629, 2
      %v735 = vrot.slane %v630, 2
      %v736 = vsel %vm713, %v734, %v735
      %v737 = vrot.slane %v631, 2
      %v738 = vsel %vm713, %v735, %v737
      %v739 = vrot.slane %v632, 2
      %v740 = vrot.slane %v633, 2
      %v741 = vsel %vm713, %v739, %v740
      %v742 = vrot.slane %v634, 2
      %v743 = vsel %vm713, %v740, %v742
      %v744 = vrot.slane %v635, 2
      %v745 = vrot.slane %v636, 2
      %v746 = vsel %vm713, %v744, %v745
      %v747 = vrot.slane %v637, 2
      %v748 = vsel %vm713, %v745, %v747
      %v749 = vrot.slane %v638, 2
      %v750 = vrot.slane %v639, 2
      %v751 = vsel %vm713, %v749, %v750
      %v752 = vrot.slane %v640, 2
      %v753 = vsel %vm713, %v750, %v752
      %v754 = vrot.slane %v641, 2
      %v755 = vrot.slane %v642, 2
      %v756 = vsel %vm713, %v754, %v755
      %v757 = vrot.slane %v643, 2
      %v758 = vsel %vm713, %v755, %v757
      %v759 = vrot.slane %v644, 2
      %v760 = vrot.slane %v645, 2
      %v761 = vsel %vm713, %v759, %v760
      %v762 = vrot.slane %v646, 2
      %v763 = vsel %vm713, %v760, %v762
      %v764 = vrot.slane %v647, 2
      %v765 = vrot.slane %v648, 2
      %v766 = vsel %vm713, %v764, %v765
      %v767 = vrot.slane %v649, 2
      %v768 = vsel %vm713, %v765, %v767
      %v769 = vrot.slane %v650, 2
      %v770 = vrot.slane %v651, 2
      %v771 = vsel %vm713, %v769, %v770
      %v772 = vrot.slane %v652, 2
      %v773 = vsel %vm713, %v770, %v772
      %v774 = vrot.slane %v653, 2
      %v775 = vrot.slane %v654, 2
      %v776 = vsel %vm713, %v774, %v775
      %v777 = vrot.slane %v655, 2
      %v778 = vsel %vm713, %v775, %v777
      %v779 = vrot.slane %v656, 2
      %v780 = vrot.slane %v657, 2
      %v781 = vsel %vm713, %v779, %v780
      %v782 = vrot.slane %v658, 2
      %v783 = vsel %vm713, %v780, %v782
      %v784 = vrot.slane %v659, 2
      %v785 = vrot.slane %v660, 2
      %v786 = vsel %vm713, %v784, %v785
      %v787 = vrot.slane %v661, 2
      %v788 = vsel %vm713, %v785, %v787
      %v789 = vrot.slane %v662, 2
      %v790 = vrot.slane %v663, 2
      %v791 = vsel %vm713, %v789, %v790
      %v792 = vrot.slane %v664, 2
      %v793 = vsel %vm713, %v790, %v792
      %v826 = vadd.f32 %v581, %v716
      %v827 = vadd.f32 %v582, %v718
      %v828 = vadd.f32 %v583, %v721
      %v829 = vadd.f32 %v584, %v723
      %v830 = vadd.f32 %v585, %v726
      %v831 = vadd.f32 %v586, %v728
      %v832 = vadd.f32 %v587, %v731
      %v833 = vadd.f32 %v588, %v733
      %v834 = vadd.f32 %v589, %v736
      %v835 = vadd.f32 %v590, %v738
      %v836 = vadd.f32 %v591, %v741
      %v837 = vadd.f32 %v592, %v743
      %v838 = vadd.f32 %v593, %v746
      %v839 = vadd.f32 %v594, %v748
      %v840 = vadd.f32 %v595, %v751
      %v841 = vadd.f32 %v596, %v753
      %v842 = vadd.f32 %v597, %v756
      %v843 = vadd.f32 %v598, %v758
      %v844 = vadd.f32 %v599, %v761
      %v845 = vadd.f32 %v600, %v763
      %v846 = vadd.f32 %v601, %v766
      %v847 = vadd.f32 %v602, %v768
      %v848 = vadd.f32 %v603, %v771
      %v849 = vadd.f32 %v604, %v773
      %v850 = vadd.f32 %v605, %v776
      %v851 = vadd.f32 %v606, %v778
      %v852 = vadd.f32 %v607, %v781
      %v853 = vadd.f32 %v608, %v783
      %v854 = vadd.f32 %v609, %v786
      %v855 = vadd.f32 %v610, %v788
      %v856 = vadd.f32 %v611, %v791
      %v857 = vadd.f32 %v612, %v793
      %s858 = sadd.s32 %s278, 1
      %s859 = smul.u32 %s858, 24
      %s860 = scalar_lea.vmem %s265, %s859
      %v861 = vld [vmem:[%s860] sm:$0xff]
      %v862 = vld [vmem:[%s860 + $0x8] sm:$0xff]
      %v863 = vld [vmem:[%s860 + $0x10] sm:$0x3]
      %v864 = vld [vmem:[%s860 + $0x18] sm:$0xff]
      %v865 = vld [vmem:[%s860 + $0x20] sm:$0xff]
      %v866 = vld [vmem:[%s860 + $0x28] sm:$0x3]
      %v867 = vld [vmem:[%s860 + $0x30] sm:$0xff]
      %v868 = vld [vmem:[%s860 + $0x38] sm:$0xff]
      %v869 = vld [vmem:[%s860 + $0x40] sm:$0x3]
      %v870 = vld [vmem:[%s860 + $0x48] sm:$0xff]
      %v871 = vld [vmem:[%s860 + $0x50] sm:$0xff]
      %v872 = vld [vmem:[%s860 + $0x58] sm:$0x3]
      %v873 = vld [vmem:[%s860 + $0x60] sm:$0xff]
      %v874 = vld [vmem:[%s860 + $0x68] sm:$0xff]
      %v875 = vld [vmem:[%s860 + $0x70] sm:$0x3]
      %v876 = vld [vmem:[%s860 + $0x78] sm:$0xff]
      %v877 = vld [vmem:[%s860 + $0x80] sm:$0xff]
      %v878 = vld [vmem:[%s860 + $0x88] sm:$0x3]
      %v879 = vld [vmem:[%s860 + $0x90] sm:$0xff]
      %v880 = vld [vmem:[%s860 + $0x98] sm:$0xff]
      %v881 = vld [vmem:[%s860 + $0xa0] sm:$0x3]
      %v882 = vld [vmem:[%s860 + $0xa8] sm:$0xff]
      %v883 = vld [vmem:[%s860 + $0xb0] sm:$0xff]
      %v884 = vld [vmem:[%s860 + $0xb8] sm:$0x3]
      %v885 = vld [vmem:[%s860 + $0xc0] sm:$0xff]
      %v886 = vld [vmem:[%s860 + $0xc8] sm:$0xff]
      %v887 = vld [vmem:[%s860 + $0xd0] sm:$0x3]
      %v888 = vld [vmem:[%s860 + $0xd8] sm:$0xff]
      %v889 = vld [vmem:[%s860 + $0xe0] sm:$0xff]
      %v890 = vld [vmem:[%s860 + $0xe8] sm:$0x3]
      %v891 = vld [vmem:[%s860 + $0xf0] sm:$0xff]
      %v892 = vld [vmem:[%s860 + $0xf8] sm:$0xff]
      %v893 = vld [vmem:[%s860 + $0x100] sm:$0x3]
      %v894 = vld [vmem:[%s860 + $0x108] sm:$0xff]
      %v895 = vld [vmem:[%s860 + $0x110] sm:$0xff]
      %v896 = vld [vmem:[%s860 + $0x118] sm:$0x3]
      %v897 = vld [vmem:[%s860 + $0x120] sm:$0xff]
      %v898 = vld [vmem:[%s860 + $0x128] sm:$0xff]
      %v899 = vld [vmem:[%s860 + $0x130] sm:$0x3]
      %v900 = vld [vmem:[%s860 + $0x138] sm:$0xff]
      %v901 = vld [vmem:[%s860 + $0x140] sm:$0xff]
      %v902 = vld [vmem:[%s860 + $0x148] sm:$0x3]
      %v903 = vld [vmem:[%s860 + $0x150] sm:$0xff]
      %v904 = vld [vmem:[%s860 + $0x158] sm:$0xff]
      %v905 = vld [vmem:[%s860 + $0x160] sm:$0x3]
      %v906 = vld [vmem:[%s860 + $0x168] sm:$0xff]
      %v907 = vld [vmem:[%s860 + $0x170] sm:$0xff]
      %v908 = vld [vmem:[%s860 + $0x178] sm:$0x3]
      %v909 = vlaneseq
      %v910 = vshrl.u32 %v909, 7
      %v911 = vsub.s32 0, %v910
      %v912 = vrot.slane %v280, %v911
      %v913 = vmul.f32 %v861, %v912
      %v914 = vmul.f32 %v862, %v912
      %v915 = vmul.f32 %v864, %v912
      %v916 = vmul.f32 %v865, %v912
      %v917 = vmul.f32 %v867, %v912
      %v918 = vmul.f32 %v868, %v912
      %v919 = vmul.f32 %v870, %v912
      %v920 = vmul.f32 %v871, %v912
      %v921 = vmul.f32 %v873, %v912
      %v922 = vmul.f32 %v874, %v912
      %v923 = vmul.f32 %v876, %v912
      %v924 = vmul.f32 %v877, %v912
      %v925 = vmul.f32 %v879, %v912
      %v926 = vmul.f32 %v880, %v912
      %v927 = vmul.f32 %v882, %v912
      %v928 = vmul.f32 %v883, %v912
      %v929 = vmul.f32 %v885, %v912
      %v930 = vmul.f32 %v886, %v912
      %v931 = vmul.f32 %v888, %v912
      %v932 = vmul.f32 %v889, %v912
      %v933 = vmul.f32 %v891, %v912
      %v934 = vmul.f32 %v892, %v912
      %v935 = vmul.f32 %v894, %v912
      %v936 = vmul.f32 %v895, %v912
      %v937 = vmul.f32 %v897, %v912
      %v938 = vmul.f32 %v898, %v912
      %v939 = vmul.f32 %v900, %v912
      %v940 = vmul.f32 %v901, %v912
      %v941 = vmul.f32 %v903, %v912
      %v942 = vmul.f32 %v904, %v912
      %v943 = vmul.f32 %v906, %v912
      %v944 = vmul.f32 %v907, %v912
      %v945 = vadd.f32 %v826, %v913
      %v946 = vadd.f32 %v827, %v914
      %v947 = vadd.f32 %v828, %v915
      %v948 = vadd.f32 %v829, %v916
      %v949 = vadd.f32 %v830, %v917
      %v950 = vadd.f32 %v831, %v918
      %v951 = vadd.f32 %v832, %v919
      %v952 = vadd.f32 %v833, %v920
      %v953 = vadd.f32 %v834, %v921
      %v954 = vadd.f32 %v835, %v922
      %v955 = vadd.f32 %v836, %v923
      %v956 = vadd.f32 %v837, %v924
      %v957 = vadd.f32 %v838, %v925
      %v958 = vadd.f32 %v839, %v926
      %v959 = vadd.f32 %v840, %v927
      %v960 = vadd.f32 %v841, %v928
      %v961 = vadd.f32 %v842, %v929
      %v962 = vadd.f32 %v843, %v930
      %v963 = vadd.f32 %v844, %v931
      %v964 = vadd.f32 %v845, %v932
      %v965 = vadd.f32 %v846, %v933
      %v966 = vadd.f32 %v847, %v934
      %v967 = vadd.f32 %v848, %v935
      %v968 = vadd.f32 %v849, %v936
      %v969 = vadd.f32 %v850, %v937
      %v970 = vadd.f32 %v851, %v938
      %v971 = vadd.f32 %v852, %v939
      %v972 = vadd.f32 %v853, %v940
      %v973 = vadd.f32 %v854, %v941
      %v974 = vadd.f32 %v855, %v942
      %v975 = vadd.f32 %v856, %v943
      %v976 = vadd.f32 %v857, %v944
      %v977 = vlaneseq
      %v978 = vshrl.u32 %v977, 7
      %v979 = vsub.s32 1, %v978
      %v980 = vrot.slane %v280, %v979
      %v981 = vmul.f32 %v861, %v980
      %v982 = vmul.f32 %v862, %v980
      %v983 = vmul.f32 %v863, %v980
      %v984 = vmul.f32 %v864, %v980
      %v985 = vmul.f32 %v865, %v980
      %v986 = vmul.f32 %v866, %v980
      %v987 = vmul.f32 %v867, %v980
      %v988 = vmul.f32 %v868, %v980
      %v989 = vmul.f32 %v869, %v980
      %v990 = vmul.f32 %v870, %v980
      %v991 = vmul.f32 %v871, %v980
      %v992 = vmul.f32 %v872, %v980
      %v993 = vmul.f32 %v873, %v980
      %v994 = vmul.f32 %v874, %v980
      %v995 = vmul.f32 %v875, %v980
      %v996 = vmul.f32 %v876, %v980
      %v997 = vmul.f32 %v877, %v980
      %v998 = vmul.f32 %v878, %v980
      %v999 = vmul.f32 %v879, %v980
      %v1000 = vmul.f32 %v880, %v980
      %v1001 = vmul.f32 %v881, %v980
      %v1002 = vmul.f32 %v882, %v980
      %v1003 = vmul.f32 %v883, %v980
      %v1004 = vmul.f32 %v884, %v980
      %v1005 = vmul.f32 %v885, %v980
      %v1006 = vmul.f32 %v886, %v980
      %v1007 = vmul.f32 %v887, %v980
      %v1008 = vmul.f32 %v888, %v980
      %v1009 = vmul.f32 %v889, %v980
      %v1010 = vmul.f32 %v890, %v980
      %v1011 = vmul.f32 %v891, %v980
      %v1012 = vmul.f32 %v892, %v980
      %v1013 = vmul.f32 %v893, %v980
      %v1014 = vmul.f32 %v894, %v980
      %v1015 = vmul.f32 %v895, %v980
      %v1016 = vmul.f32 %v896, %v980
      %v1017 = vmul.f32 %v897, %v980
      %v1018 = vmul.f32 %v898, %v980
      %v1019 = vmul.f32 %v899, %v980
      %v1020 = vmul.f32 %v900, %v980
      %v1021 = vmul.f32 %v901, %v980
      %v1022 = vmul.f32 %v902, %v980
      %v1023 = vmul.f32 %v903, %v980
      %v1024 = vmul.f32 %v904, %v980
      %v1025 = vmul.f32 %v905, %v980
      %v1026 = vmul.f32 %v906, %v980
      %v1027 = vmul.f32 %v907, %v980
      %v1028 = vmul.f32 %v908, %v980
      %v1077 = vrot.slane %v981, 1
      %v1078 = vrot.slane %v982, 1
      %v1079 = vsel %vm468, %v1077, %v1078
      %v1080 = vrot.slane %v983, 1
      %v1081 = vsel %vm468, %v1078, %v1080
      %v1082 = vrot.slane %v984, 1
      %v1083 = vrot.slane %v985, 1
      %v1084 = vsel %vm468, %v1082, %v1083
      %v1085 = vrot.slane %v986, 1
      %v1086 = vsel %vm468, %v1083, %v1085
      %v1087 = vrot.slane %v987, 1
      %v1088 = vrot.slane %v988, 1
      %v1089 = vsel %vm468, %v1087, %v1088
      %v1090 = vrot.slane %v989, 1
      %v1091 = vsel %vm468, %v1088, %v1090
      %v1092 = vrot.slane %v990, 1
      %v1093 = vrot.slane %v991, 1
      %v1094 = vsel %vm468, %v1092, %v1093
      %v1095 = vrot.slane %v992, 1
      %v1096 = vsel %vm468, %v1093, %v1095
      %v1097 = vrot.slane %v993, 1
      %v1098 = vrot.slane %v994, 1
      %v1099 = vsel %vm468, %v1097, %v1098
      %v1100 = vrot.slane %v995, 1
      %v1101 = vsel %vm468, %v1098, %v1100
      %v1102 = vrot.slane %v996, 1
      %v1103 = vrot.slane %v997, 1
      %v1104 = vsel %vm468, %v1102, %v1103
      %v1105 = vrot.slane %v998, 1
      %v1106 = vsel %vm468, %v1103, %v1105
      %v1107 = vrot.slane %v999, 1
      %v1108 = vrot.slane %v1000, 1
      %v1109 = vsel %vm468, %v1107, %v1108
      %v1110 = vrot.slane %v1001, 1
      %v1111 = vsel %vm468, %v1108, %v1110
      %v1112 = vrot.slane %v1002, 1
      %v1113 = vrot.slane %v1003, 1
      %v1114 = vsel %vm468, %v1112, %v1113
      %v1115 = vrot.slane %v1004, 1
      %v1116 = vsel %vm468, %v1113, %v1115
      %v1117 = vrot.slane %v1005, 1
      %v1118 = vrot.slane %v1006, 1
      %v1119 = vsel %vm468, %v1117, %v1118
      %v1120 = vrot.slane %v1007, 1
      %v1121 = vsel %vm468, %v1118, %v1120
      %v1122 = vrot.slane %v1008, 1
      %v1123 = vrot.slane %v1009, 1
      %v1124 = vsel %vm468, %v1122, %v1123
      %v1125 = vrot.slane %v1010, 1
      %v1126 = vsel %vm468, %v1123, %v1125
      %v1127 = vrot.slane %v1011, 1
      %v1128 = vrot.slane %v1012, 1
      %v1129 = vsel %vm468, %v1127, %v1128
      %v1130 = vrot.slane %v1013, 1
      %v1131 = vsel %vm468, %v1128, %v1130
      %v1132 = vrot.slane %v1014, 1
      %v1133 = vrot.slane %v1015, 1
      %v1134 = vsel %vm468, %v1132, %v1133
      %v1135 = vrot.slane %v1016, 1
      %v1136 = vsel %vm468, %v1133, %v1135
      %v1137 = vrot.slane %v1017, 1
      %v1138 = vrot.slane %v1018, 1
      %v1139 = vsel %vm468, %v1137, %v1138
      %v1140 = vrot.slane %v1019, 1
      %v1141 = vsel %vm468, %v1138, %v1140
      %v1142 = vrot.slane %v1020, 1
      %v1143 = vrot.slane %v1021, 1
      %v1144 = vsel %vm468, %v1142, %v1143
      %v1145 = vrot.slane %v1022, 1
      %v1146 = vsel %vm468, %v1143, %v1145
      %v1147 = vrot.slane %v1023, 1
      %v1148 = vrot.slane %v1024, 1
      %v1149 = vsel %vm468, %v1147, %v1148
      %v1150 = vrot.slane %v1025, 1
      %v1151 = vsel %vm468, %v1148, %v1150
      %v1152 = vrot.slane %v1026, 1
      %v1153 = vrot.slane %v1027, 1
      %v1154 = vsel %vm468, %v1152, %v1153
      %v1155 = vrot.slane %v1028, 1
      %v1156 = vsel %vm468, %v1153, %v1155
      %v1189 = vadd.f32 %v945, %v1079
      %v1190 = vadd.f32 %v946, %v1081
      %v1191 = vadd.f32 %v947, %v1084
      %v1192 = vadd.f32 %v948, %v1086
      %v1193 = vadd.f32 %v949, %v1089
      %v1194 = vadd.f32 %v950, %v1091
      %v1195 = vadd.f32 %v951, %v1094
      %v1196 = vadd.f32 %v952, %v1096
      %v1197 = vadd.f32 %v953, %v1099
      %v1198 = vadd.f32 %v954, %v1101
      %v1199 = vadd.f32 %v955, %v1104
      %v1200 = vadd.f32 %v956, %v1106
      %v1201 = vadd.f32 %v957, %v1109
      %v1202 = vadd.f32 %v958, %v1111
      %v1203 = vadd.f32 %v959, %v1114
      %v1204 = vadd.f32 %v960, %v1116
      %v1205 = vadd.f32 %v961, %v1119
      %v1206 = vadd.f32 %v962, %v1121
      %v1207 = vadd.f32 %v963, %v1124
      %v1208 = vadd.f32 %v964, %v1126
      %v1209 = vadd.f32 %v965, %v1129
      %v1210 = vadd.f32 %v966, %v1131
      %v1211 = vadd.f32 %v967, %v1134
      %v1212 = vadd.f32 %v968, %v1136
      %v1213 = vadd.f32 %v969, %v1139
      %v1214 = vadd.f32 %v970, %v1141
      %v1215 = vadd.f32 %v971, %v1144
      %v1216 = vadd.f32 %v972, %v1146
      %v1217 = vadd.f32 %v973, %v1149
      %v1218 = vadd.f32 %v974, %v1151
      %v1219 = vadd.f32 %v975, %v1154
      %v1220 = vadd.f32 %v976, %v1156
      %v1221 = vlaneseq
      %v1222 = vshrl.u32 %v1221, 7
      %v1223 = vsub.s32 2, %v1222
      %v1224 = vrot.slane %v280, %v1223
      %v1225 = vmul.f32 %v861, %v1224
      %v1226 = vmul.f32 %v862, %v1224
      %v1227 = vmul.f32 %v863, %v1224
      %v1228 = vmul.f32 %v864, %v1224
      %v1229 = vmul.f32 %v865, %v1224
      %v1230 = vmul.f32 %v866, %v1224
      %v1231 = vmul.f32 %v867, %v1224
      %v1232 = vmul.f32 %v868, %v1224
      %v1233 = vmul.f32 %v869, %v1224
      %v1234 = vmul.f32 %v870, %v1224
      %v1235 = vmul.f32 %v871, %v1224
      %v1236 = vmul.f32 %v872, %v1224
      %v1237 = vmul.f32 %v873, %v1224
      %v1238 = vmul.f32 %v874, %v1224
      %v1239 = vmul.f32 %v875, %v1224
      %v1240 = vmul.f32 %v876, %v1224
      %v1241 = vmul.f32 %v877, %v1224
      %v1242 = vmul.f32 %v878, %v1224
      %v1243 = vmul.f32 %v879, %v1224
      %v1244 = vmul.f32 %v880, %v1224
      %v1245 = vmul.f32 %v881, %v1224
      %v1246 = vmul.f32 %v882, %v1224
      %v1247 = vmul.f32 %v883, %v1224
      %v1248 = vmul.f32 %v884, %v1224
      %v1249 = vmul.f32 %v885, %v1224
      %v1250 = vmul.f32 %v886, %v1224
      %v1251 = vmul.f32 %v887, %v1224
      %v1252 = vmul.f32 %v888, %v1224
      %v1253 = vmul.f32 %v889, %v1224
      %v1254 = vmul.f32 %v890, %v1224
      %v1255 = vmul.f32 %v891, %v1224
      %v1256 = vmul.f32 %v892, %v1224
      %v1257 = vmul.f32 %v893, %v1224
      %v1258 = vmul.f32 %v894, %v1224
      %v1259 = vmul.f32 %v895, %v1224
      %v1260 = vmul.f32 %v896, %v1224
      %v1261 = vmul.f32 %v897, %v1224
      %v1262 = vmul.f32 %v898, %v1224
      %v1263 = vmul.f32 %v899, %v1224
      %v1264 = vmul.f32 %v900, %v1224
      %v1265 = vmul.f32 %v901, %v1224
      %v1266 = vmul.f32 %v902, %v1224
      %v1267 = vmul.f32 %v903, %v1224
      %v1268 = vmul.f32 %v904, %v1224
      %v1269 = vmul.f32 %v905, %v1224
      %v1270 = vmul.f32 %v906, %v1224
      %v1271 = vmul.f32 %v907, %v1224
      %v1272 = vmul.f32 %v908, %v1224
      %v1321 = vrot.slane %v1225, 2
      %v1322 = vrot.slane %v1226, 2
      %v1323 = vsel %vm713, %v1321, %v1322
      %v1324 = vrot.slane %v1227, 2
      %v1325 = vsel %vm713, %v1322, %v1324
      %v1326 = vrot.slane %v1228, 2
      %v1327 = vrot.slane %v1229, 2
      %v1328 = vsel %vm713, %v1326, %v1327
      %v1329 = vrot.slane %v1230, 2
      %v1330 = vsel %vm713, %v1327, %v1329
      %v1331 = vrot.slane %v1231, 2
      %v1332 = vrot.slane %v1232, 2
      %v1333 = vsel %vm713, %v1331, %v1332
      %v1334 = vrot.slane %v1233, 2
      %v1335 = vsel %vm713, %v1332, %v1334
      %v1336 = vrot.slane %v1234, 2
      %v1337 = vrot.slane %v1235, 2
      %v1338 = vsel %vm713, %v1336, %v1337
      %v1339 = vrot.slane %v1236, 2
      %v1340 = vsel %vm713, %v1337, %v1339
      %v1341 = vrot.slane %v1237, 2
      %v1342 = vrot.slane %v1238, 2
      %v1343 = vsel %vm713, %v1341, %v1342
      %v1344 = vrot.slane %v1239, 2
      %v1345 = vsel %vm713, %v1342, %v1344
      %v1346 = vrot.slane %v1240, 2
      %v1347 = vrot.slane %v1241, 2
      %v1348 = vsel %vm713, %v1346, %v1347
      %v1349 = vrot.slane %v1242, 2
      %v1350 = vsel %vm713, %v1347, %v1349
      %v1351 = vrot.slane %v1243, 2
      %v1352 = vrot.slane %v1244, 2
      %v1353 = vsel %vm713, %v1351, %v1352
      %v1354 = vrot.slane %v1245, 2
      %v1355 = vsel %vm713, %v1352, %v1354
      %v1356 = vrot.slane %v1246, 2
      %v1357 = vrot.slane %v1247, 2
      %v1358 = vsel %vm713, %v1356, %v1357
      %v1359 = vrot.slane %v1248, 2
      %v1360 = vsel %vm713, %v1357, %v1359
      %v1361 = vrot.slane %v1249, 2
      %v1362 = vrot.slane %v1250, 2
      %v1363 = vsel %vm713, %v1361, %v1362
      %v1364 = vrot.slane %v1251, 2
      %v1365 = vsel %vm713, %v1362, %v1364
      %v1366 = vrot.slane %v1252, 2
      %v1367 = vrot.slane %v1253, 2
      %v1368 = vsel %vm713, %v1366, %v1367
      %v1369 = vrot.slane %v1254, 2
      %v1370 = vsel %vm713, %v1367, %v1369
      %v1371 = vrot.slane %v1255, 2
      %v1372 = vrot.slane %v1256, 2
      %v1373 = vsel %vm713, %v1371, %v1372
      %v1374 = vrot.slane %v1257, 2
      %v1375 = vsel %vm713, %v1372, %v1374
      %v1376 = vrot.slane %v1258, 2
      %v1377 = vrot.slane %v1259, 2
      %v1378 = vsel %vm713, %v1376, %v1377
      %v1379 = vrot.slane %v1260, 2
      %v1380 = vsel %vm713, %v1377, %v1379
      %v1381 = vrot.slane %v1261, 2
      %v1382 = vrot.slane %v1262, 2
      %v1383 = vsel %vm713, %v1381, %v1382
      %v1384 = vrot.slane %v1263, 2
      %v1385 = vsel %vm713, %v1382, %v1384
      %v1386 = vrot.slane %v1264, 2
      %v1387 = vrot.slane %v1265, 2
      %v1388 = vsel %vm713, %v1386, %v1387
      %v1389 = vrot.slane %v1266, 2
      %v1390 = vsel %vm713, %v1387, %v1389
      %v1391 = vrot.slane %v1267, 2
      %v1392 = vrot.slane %v1268, 2
      %v1393 = vsel %vm713, %v1391, %v1392
      %v1394 = vrot.slane %v1269, 2
      %v1395 = vsel %vm713, %v1392, %v1394
      %v1396 = vrot.slane %v1270, 2
      %v1397 = vrot.slane %v1271, 2
      %v1398 = vsel %vm713, %v1396, %v1397
      %v1399 = vrot.slane %v1272, 2
      %v1400 = vsel %vm713, %v1397, %v1399
      %v1433 = vadd.f32 %v1189, %v1323
      %v1434 = vadd.f32 %v1190, %v1325
      %v1435 = vadd.f32 %v1191, %v1328
      %v1436 = vadd.f32 %v1192, %v1330
      %v1437 = vadd.f32 %v1193, %v1333
      %v1438 = vadd.f32 %v1194, %v1335
      %v1439 = vadd.f32 %v1195, %v1338
      %v1440 = vadd.f32 %v1196, %v1340
      %v1441 = vadd.f32 %v1197, %v1343
      %v1442 = vadd.f32 %v1198, %v1345
      %v1443 = vadd.f32 %v1199, %v1348
      %v1444 = vadd.f32 %v1200, %v1350
      %v1445 = vadd.f32 %v1201, %v1353
      %v1446 = vadd.f32 %v1202, %v1355
      %v1447 = vadd.f32 %v1203, %v1358
      %v1448 = vadd.f32 %v1204, %v1360
      %v1449 = vadd.f32 %v1205, %v1363
      %v1450 = vadd.f32 %v1206, %v1365
      %v1451 = vadd.f32 %v1207, %v1368
      %v1452 = vadd.f32 %v1208, %v1370
      %v1453 = vadd.f32 %v1209, %v1373
      %v1454 = vadd.f32 %v1210, %v1375
      %v1455 = vadd.f32 %v1211, %v1378
      %v1456 = vadd.f32 %v1212, %v1380
      %v1457 = vadd.f32 %v1213, %v1383
      %v1458 = vadd.f32 %v1214, %v1385
      %v1459 = vadd.f32 %v1215, %v1388
      %v1460 = vadd.f32 %v1216, %v1390
      %v1461 = vadd.f32 %v1217, %v1393
      %v1462 = vadd.f32 %v1218, %v1395
      %v1463 = vadd.f32 %v1219, %v1398
      %v1464 = vadd.f32 %v1220, %v1400
      %s1465 = sadd.s32 %s278, 2
      %s1466 = smul.u32 %s1465, 24
      %s1467 = scalar_lea.vmem %s265, %s1466
      %v1468 = vld [vmem:[%s1467] sm:$0xff]
      %v1469 = vld [vmem:[%s1467 + $0x8] sm:$0xff]
      %v1470 = vld [vmem:[%s1467 + $0x10] sm:$0x3]
      %v1471 = vld [vmem:[%s1467 + $0x18] sm:$0xff]
      %v1472 = vld [vmem:[%s1467 + $0x20] sm:$0xff]
      %v1473 = vld [vmem:[%s1467 + $0x28] sm:$0x3]
      %v1474 = vld [vmem:[%s1467 + $0x30] sm:$0xff]
      %v1475 = vld [vmem:[%s1467 + $0x38] sm:$0xff]
      %v1476 = vld [vmem:[%s1467 + $0x40] sm:$0x3]
      %v1477 = vld [vmem:[%s1467 + $0x48] sm:$0xff]
      %v1478 = vld [vmem:[%s1467 + $0x50] sm:$0xff]
      %v1479 = vld [vmem:[%s1467 + $0x58] sm:$0x3]
      %v1480 = vld [vmem:[%s1467 + $0x60] sm:$0xff]
      %v1481 = vld [vmem:[%s1467 + $0x68] sm:$0xff]
      %v1482 = vld [vmem:[%s1467 + $0x70] sm:$0x3]
      %v1483 = vld [vmem:[%s1467 + $0x78] sm:$0xff]
      %v1484 = vld [vmem:[%s1467 + $0x80] sm:$0xff]
      %v1485 = vld [vmem:[%s1467 + $0x88] sm:$0x3]
      %v1486 = vld [vmem:[%s1467 + $0x90] sm:$0xff]
      %v1487 = vld [vmem:[%s1467 + $0x98] sm:$0xff]
      %v1488 = vld [vmem:[%s1467 + $0xa0] sm:$0x3]
      %v1489 = vld [vmem:[%s1467 + $0xa8] sm:$0xff]
      %v1490 = vld [vmem:[%s1467 + $0xb0] sm:$0xff]
      %v1491 = vld [vmem:[%s1467 + $0xb8] sm:$0x3]
      %v1492 = vld [vmem:[%s1467 + $0xc0] sm:$0xff]
      %v1493 = vld [vmem:[%s1467 + $0xc8] sm:$0xff]
      %v1494 = vld [vmem:[%s1467 + $0xd0] sm:$0x3]
      %v1495 = vld [vmem:[%s1467 + $0xd8] sm:$0xff]
      %v1496 = vld [vmem:[%s1467 + $0xe0] sm:$0xff]
      %v1497 = vld [vmem:[%s1467 + $0xe8] sm:$0x3]
      %v1498 = vld [vmem:[%s1467 + $0xf0] sm:$0xff]
      %v1499 = vld [vmem:[%s1467 + $0xf8] sm:$0xff]
      %v1500 = vld [vmem:[%s1467 + $0x100] sm:$0x3]
      %v1501 = vld [vmem:[%s1467 + $0x108] sm:$0xff]
      %v1502 = vld [vmem:[%s1467 + $0x110] sm:$0xff]
      %v1503 = vld [vmem:[%s1467 + $0x118] sm:$0x3]
      %v1504 = vld [vmem:[%s1467 + $0x120] sm:$0xff]
      %v1505 = vld [vmem:[%s1467 + $0x128] sm:$0xff]
      %v1506 = vld [vmem:[%s1467 + $0x130] sm:$0x3]
      %v1507 = vld [vmem:[%s1467 + $0x138] sm:$0xff]
      %v1508 = vld [vmem:[%s1467 + $0x140] sm:$0xff]
      %v1509 = vld [vmem:[%s1467 + $0x148] sm:$0x3]
      %v1510 = vld [vmem:[%s1467 + $0x150] sm:$0xff]
      %v1511 = vld [vmem:[%s1467 + $0x158] sm:$0xff]
      %v1512 = vld [vmem:[%s1467 + $0x160] sm:$0x3]
      %v1513 = vld [vmem:[%s1467 + $0x168] sm:$0xff]
      %v1514 = vld [vmem:[%s1467 + $0x170] sm:$0xff]
      %v1515 = vld [vmem:[%s1467 + $0x178] sm:$0x3]
      %v1516 = vlaneseq
      %v1517 = vshrl.u32 %v1516, 7
      %v1518 = vsub.s32 0, %v1517
      %v1519 = vrot.slane %v281, %v1518
      %v1520 = vmul.f32 %v1468, %v1519
      %v1521 = vmul.f32 %v1469, %v1519
      %v1522 = vmul.f32 %v1471, %v1519
      %v1523 = vmul.f32 %v1472, %v1519
      %v1524 = vmul.f32 %v1474, %v1519
      %v1525 = vmul.f32 %v1475, %v1519
      %v1526 = vmul.f32 %v1477, %v1519
      %v1527 = vmul.f32 %v1478, %v1519
      %v1528 = vmul.f32 %v1480, %v1519
      %v1529 = vmul.f32 %v1481, %v1519
      %v1530 = vmul.f32 %v1483, %v1519
      %v1531 = vmul.f32 %v1484, %v1519
      %v1532 = vmul.f32 %v1486, %v1519
      %v1533 = vmul.f32 %v1487, %v1519
      %v1534 = vmul.f32 %v1489, %v1519
      %v1535 = vmul.f32 %v1490, %v1519
      %v1536 = vmul.f32 %v1492, %v1519
      %v1537 = vmul.f32 %v1493, %v1519
      %v1538 = vmul.f32 %v1495, %v1519
      %v1539 = vmul.f32 %v1496, %v1519
      %v1540 = vmul.f32 %v1498, %v1519
      %v1541 = vmul.f32 %v1499, %v1519
      %v1542 = vmul.f32 %v1501, %v1519
      %v1543 = vmul.f32 %v1502, %v1519
      %v1544 = vmul.f32 %v1504, %v1519
      %v1545 = vmul.f32 %v1505, %v1519
      %v1546 = vmul.f32 %v1507, %v1519
      %v1547 = vmul.f32 %v1508, %v1519
      %v1548 = vmul.f32 %v1510, %v1519
      %v1549 = vmul.f32 %v1511, %v1519
      %v1550 = vmul.f32 %v1513, %v1519
      %v1551 = vmul.f32 %v1514, %v1519
      %v1552 = vadd.f32 %v1433, %v1520
      %v1553 = vadd.f32 %v1434, %v1521
      %v1554 = vadd.f32 %v1435, %v1522
      %v1555 = vadd.f32 %v1436, %v1523
      %v1556 = vadd.f32 %v1437, %v1524
      %v1557 = vadd.f32 %v1438, %v1525
      %v1558 = vadd.f32 %v1439, %v1526
      %v1559 = vadd.f32 %v1440, %v1527
      %v1560 = vadd.f32 %v1441, %v1528
      %v1561 = vadd.f32 %v1442, %v1529
      %v1562 = vadd.f32 %v1443, %v1530
      %v1563 = vadd.f32 %v1444, %v1531
      %v1564 = vadd.f32 %v1445, %v1532
      %v1565 = vadd.f32 %v1446, %v1533
      %v1566 = vadd.f32 %v1447, %v1534
      %v1567 = vadd.f32 %v1448, %v1535
      %v1568 = vadd.f32 %v1449, %v1536
      %v1569 = vadd.f32 %v1450, %v1537
      %v1570 = vadd.f32 %v1451, %v1538
      %v1571 = vadd.f32 %v1452, %v1539
      %v1572 = vadd.f32 %v1453, %v1540
      %v1573 = vadd.f32 %v1454, %v1541
      %v1574 = vadd.f32 %v1455, %v1542
      %v1575 = vadd.f32 %v1456, %v1543
      %v1576 = vadd.f32 %v1457, %v1544
      %v1577 = vadd.f32 %v1458, %v1545
      %v1578 = vadd.f32 %v1459, %v1546
      %v1579 = vadd.f32 %v1460, %v1547
      %v1580 = vadd.f32 %v1461, %v1548
      %v1581 = vadd.f32 %v1462, %v1549
      %v1582 = vadd.f32 %v1463, %v1550
      %v1583 = vadd.f32 %v1464, %v1551
      %v1584 = vlaneseq
      %v1585 = vshrl.u32 %v1584, 7
      %v1586 = vsub.s32 1, %v1585
      %v1587 = vrot.slane %v281, %v1586
      %v1588 = vmul.f32 %v1468, %v1587
      %v1589 = vmul.f32 %v1469, %v1587
      %v1590 = vmul.f32 %v1470, %v1587
      %v1591 = vmul.f32 %v1471, %v1587
      %v1592 = vmul.f32 %v1472, %v1587
      %v1593 = vmul.f32 %v1473, %v1587
      %v1594 = vmul.f32 %v1474, %v1587
      %v1595 = vmul.f32 %v1475, %v1587
      %v1596 = vmul.f32 %v1476, %v1587
      %v1597 = vmul.f32 %v1477, %v1587
      %v1598 = vmul.f32 %v1478, %v1587
      %v1599 = vmul.f32 %v1479, %v1587
      %v1600 = vmul.f32 %v1480, %v1587
      %v1601 = vmul.f32 %v1481, %v1587
      %v1602 = vmul.f32 %v1482, %v1587
      %v1603 = vmul.f32 %v1483, %v1587
      %v1604 = vmul.f32 %v1484, %v1587
      %v1605 = vmul.f32 %v1485, %v1587
      %v1606 = vmul.f32 %v1486, %v1587
      %v1607 = vmul.f32 %v1487, %v1587
      %v1608 = vmul.f32 %v1488, %v1587
      %v1609 = vmul.f32 %v1489, %v1587
      %v1610 = vmul.f32 %v1490, %v1587
      %v1611 = vmul.f32 %v1491, %v1587
      %v1612 = vmul.f32 %v1492, %v1587
      %v1613 = vmul.f32 %v1493, %v1587
      %v1614 = vmul.f32 %v1494, %v1587
      %v1615 = vmul.f32 %v1495, %v1587
      %v1616 = vmul.f32 %v1496, %v1587
      %v1617 = vmul.f32 %v1497, %v1587
      %v1618 = vmul.f32 %v1498, %v1587
      %v1619 = vmul.f32 %v1499, %v1587
      %v1620 = vmul.f32 %v1500, %v1587
      %v1621 = vmul.f32 %v1501, %v1587
      %v1622 = vmul.f32 %v1502, %v1587
      %v1623 = vmul.f32 %v1503, %v1587
      %v1624 = vmul.f32 %v1504, %v1587
      %v1625 = vmul.f32 %v1505, %v1587
      %v1626 = vmul.f32 %v1506, %v1587
      %v1627 = vmul.f32 %v1507, %v1587
      %v1628 = vmul.f32 %v1508, %v1587
      %v1629 = vmul.f32 %v1509, %v1587
      %v1630 = vmul.f32 %v1510, %v1587
      %v1631 = vmul.f32 %v1511, %v1587
      %v1632 = vmul.f32 %v1512, %v1587
      %v1633 = vmul.f32 %v1513, %v1587
      %v1634 = vmul.f32 %v1514, %v1587
      %v1635 = vmul.f32 %v1515, %v1587
      %v1684 = vrot.slane %v1588, 1
      %v1685 = vrot.slane %v1589, 1
      %v1686 = vsel %vm468, %v1684, %v1685
      %v1687 = vrot.slane %v1590, 1
      %v1688 = vsel %vm468, %v1685, %v1687
      %v1689 = vrot.slane %v1591, 1
      %v1690 = vrot.slane %v1592, 1
      %v1691 = vsel %vm468, %v1689, %v1690
      %v1692 = vrot.slane %v1593, 1
      %v1693 = vsel %vm468, %v1690, %v1692
      %v1694 = vrot.slane %v1594, 1
      %v1695 = vrot.slane %v1595, 1
      %v1696 = vsel %vm468, %v1694, %v1695
      %v1697 = vrot.slane %v1596, 1
      %v1698 = vsel %vm468, %v1695, %v1697
      %v1699 = vrot.slane %v1597, 1
      %v1700 = vrot.slane %v1598, 1
      %v1701 = vsel %vm468, %v1699, %v1700
      %v1702 = vrot.slane %v1599, 1
      %v1703 = vsel %vm468, %v1700, %v1702
      %v1704 = vrot.slane %v1600, 1
      %v1705 = vrot.slane %v1601, 1
      %v1706 = vsel %vm468, %v1704, %v1705
      %v1707 = vrot.slane %v1602, 1
      %v1708 = vsel %vm468, %v1705, %v1707
      %v1709 = vrot.slane %v1603, 1
      %v1710 = vrot.slane %v1604, 1
      %v1711 = vsel %vm468, %v1709, %v1710
      %v1712 = vrot.slane %v1605, 1
      %v1713 = vsel %vm468, %v1710, %v1712
      %v1714 = vrot.slane %v1606, 1
      %v1715 = vrot.slane %v1607, 1
      %v1716 = vsel %vm468, %v1714, %v1715
      %v1717 = vrot.slane %v1608, 1
      %v1718 = vsel %vm468, %v1715, %v1717
      %v1719 = vrot.slane %v1609, 1
      %v1720 = vrot.slane %v1610, 1
      %v1721 = vsel %vm468, %v1719, %v1720
      %v1722 = vrot.slane %v1611, 1
      %v1723 = vsel %vm468, %v1720, %v1722
      %v1724 = vrot.slane %v1612, 1
      %v1725 = vrot.slane %v1613, 1
      %v1726 = vsel %vm468, %v1724, %v1725
      %v1727 = vrot.slane %v1614, 1
      %v1728 = vsel %vm468, %v1725, %v1727
      %v1729 = vrot.slane %v1615, 1
      %v1730 = vrot.slane %v1616, 1
      %v1731 = vsel %vm468, %v1729, %v1730
      %v1732 = vrot.slane %v1617, 1
      %v1733 = vsel %vm468, %v1730, %v1732
      %v1734 = vrot.slane %v1618, 1
      %v1735 = vrot.slane %v1619, 1
      %v1736 = vsel %vm468, %v1734, %v1735
      %v1737 = vrot.slane %v1620, 1
      %v1738 = vsel %vm468, %v1735, %v1737
      %v1739 = vrot.slane %v1621, 1
      %v1740 = vrot.slane %v1622, 1
      %v1741 = vsel %vm468, %v1739, %v1740
      %v1742 = vrot.slane %v1623, 1
      %v1743 = vsel %vm468, %v1740, %v1742
      %v1744 = vrot.slane %v1624, 1
      %v1745 = vrot.slane %v1625, 1
      %v1746 = vsel %vm468, %v1744, %v1745
      %v1747 = vrot.slane %v1626, 1
      %v1748 = vsel %vm468, %v1745, %v1747
      %v1749 = vrot.slane %v1627, 1
      %v1750 = vrot.slane %v1628, 1
      %v1751 = vsel %vm468, %v1749, %v1750
      %v1752 = vrot.slane %v1629, 1
      %v1753 = vsel %vm468, %v1750, %v1752
      %v1754 = vrot.slane %v1630, 1
      %v1755 = vrot.slane %v1631, 1
      %v1756 = vsel %vm468, %v1754, %v1755
      %v1757 = vrot.slane %v1632, 1
      %v1758 = vsel %vm468, %v1755, %v1757
      %v1759 = vrot.slane %v1633, 1
      %v1760 = vrot.slane %v1634, 1
      %v1761 = vsel %vm468, %v1759, %v1760
      %v1762 = vrot.slane %v1635, 1
      %v1763 = vsel %vm468, %v1760, %v1762
      %v1796 = vadd.f32 %v1552, %v1686
      %v1797 = vadd.f32 %v1553, %v1688
      %v1798 = vadd.f32 %v1554, %v1691
      %v1799 = vadd.f32 %v1555, %v1693
      %v1800 = vadd.f32 %v1556, %v1696
      %v1801 = vadd.f32 %v1557, %v1698
      %v1802 = vadd.f32 %v1558, %v1701
      %v1803 = vadd.f32 %v1559, %v1703
      %v1804 = vadd.f32 %v1560, %v1706
      %v1805 = vadd.f32 %v1561, %v1708
      %v1806 = vadd.f32 %v1562, %v1711
      %v1807 = vadd.f32 %v1563, %v1713
      %v1808 = vadd.f32 %v1564, %v1716
      %v1809 = vadd.f32 %v1565, %v1718
      %v1810 = vadd.f32 %v1566, %v1721
      %v1811 = vadd.f32 %v1567, %v1723
      %v1812 = vadd.f32 %v1568, %v1726
      %v1813 = vadd.f32 %v1569, %v1728
      %v1814 = vadd.f32 %v1570, %v1731
      %v1815 = vadd.f32 %v1571, %v1733
      %v1816 = vadd.f32 %v1572, %v1736
      %v1817 = vadd.f32 %v1573, %v1738
      %v1818 = vadd.f32 %v1574, %v1741
      %v1819 = vadd.f32 %v1575, %v1743
      %v1820 = vadd.f32 %v1576, %v1746
      %v1821 = vadd.f32 %v1577, %v1748
      %v1822 = vadd.f32 %v1578, %v1751
      %v1823 = vadd.f32 %v1579, %v1753
      %v1824 = vadd.f32 %v1580, %v1756
      %v1825 = vadd.f32 %v1581, %v1758
      %v1826 = vadd.f32 %v1582, %v1761
      %v1827 = vadd.f32 %v1583, %v1763
      %v1828 = vlaneseq
      %v1829 = vshrl.u32 %v1828, 7
      %v1830 = vsub.s32 2, %v1829
      %v1831 = vrot.slane %v281, %v1830
      %v1832 = vmul.f32 %v1468, %v1831
      %v1833 = vmul.f32 %v1469, %v1831
      %v1834 = vmul.f32 %v1470, %v1831
      %v1835 = vmul.f32 %v1471, %v1831
      %v1836 = vmul.f32 %v1472, %v1831
      %v1837 = vmul.f32 %v1473, %v1831
      %v1838 = vmul.f32 %v1474, %v1831
      %v1839 = vmul.f32 %v1475, %v1831
      %v1840 = vmul.f32 %v1476, %v1831
      %v1841 = vmul.f32 %v1477, %v1831
      %v1842 = vmul.f32 %v1478, %v1831
      %v1843 = vmul.f32 %v1479, %v1831
      %v1844 = vmul.f32 %v1480, %v1831
      %v1845 = vmul.f32 %v1481, %v1831
      %v1846 = vmul.f32 %v1482, %v1831
      %v1847 = vmul.f32 %v1483, %v1831
      %v1848 = vmul.f32 %v1484, %v1831
      %v1849 = vmul.f32 %v1485, %v1831
      %v1850 = vmul.f32 %v1486, %v1831
      %v1851 = vmul.f32 %v1487, %v1831
      %v1852 = vmul.f32 %v1488, %v1831
      %v1853 = vmul.f32 %v1489, %v1831
      %v1854 = vmul.f32 %v1490, %v1831
      %v1855 = vmul.f32 %v1491, %v1831
      %v1856 = vmul.f32 %v1492, %v1831
      %v1857 = vmul.f32 %v1493, %v1831
      %v1858 = vmul.f32 %v1494, %v1831
      %v1859 = vmul.f32 %v1495, %v1831
      %v1860 = vmul.f32 %v1496, %v1831
      %v1861 = vmul.f32 %v1497, %v1831
      %v1862 = vmul.f32 %v1498, %v1831
      %v1863 = vmul.f32 %v1499, %v1831
      %v1864 = vmul.f32 %v1500, %v1831
      %v1865 = vmul.f32 %v1501, %v1831
      %v1866 = vmul.f32 %v1502, %v1831
      %v1867 = vmul.f32 %v1503, %v1831
      %v1868 = vmul.f32 %v1504, %v1831
      %v1869 = vmul.f32 %v1505, %v1831
      %v1870 = vmul.f32 %v1506, %v1831
      %v1871 = vmul.f32 %v1507, %v1831
      %v1872 = vmul.f32 %v1508, %v1831
      %v1873 = vmul.f32 %v1509, %v1831
      %v1874 = vmul.f32 %v1510, %v1831
      %v1875 = vmul.f32 %v1511, %v1831
      %v1876 = vmul.f32 %v1512, %v1831
      %v1877 = vmul.f32 %v1513, %v1831
      %v1878 = vmul.f32 %v1514, %v1831
      %v1879 = vmul.f32 %v1515, %v1831
      %v1928 = vrot.slane %v1832, 2
      %v1929 = vrot.slane %v1833, 2
      %v1930 = vsel %vm713, %v1928, %v1929
      %v1931 = vrot.slane %v1834, 2
      %v1932 = vsel %vm713, %v1929, %v1931
      %v1933 = vrot.slane %v1835, 2
      %v1934 = vrot.slane %v1836, 2
      %v1935 = vsel %vm713, %v1933, %v1934
      %v1936 = vrot.slane %v1837, 2
      %v1937 = vsel %vm713, %v1934, %v1936
      %v1938 = vrot.slane %v1838, 2
      %v1939 = vrot.slane %v1839, 2
      %v1940 = vsel %vm713, %v1938, %v1939
      %v1941 = vrot.slane %v1840, 2
      %v1942 = vsel %vm713, %v1939, %v1941
      %v1943 = vrot.slane %v1841, 2
      %v1944 = vrot.slane %v1842, 2
      %v1945 = vsel %vm713, %v1943, %v1944
      %v1946 = vrot.slane %v1843, 2
      %v1947 = vsel %vm713, %v1944, %v1946
      %v1948 = vrot.slane %v1844, 2
      %v1949 = vrot.slane %v1845, 2
      %v1950 = vsel %vm713, %v1948, %v1949
      %v1951 = vrot.slane %v1846, 2
      %v1952 = vsel %vm713, %v1949, %v1951
      %v1953 = vrot.slane %v1847, 2
      %v1954 = vrot.slane %v1848, 2
      %v1955 = vsel %vm713, %v1953, %v1954
      %v1956 = vrot.slane %v1849, 2
      %v1957 = vsel %vm713, %v1954, %v1956
      %v1958 = vrot.slane %v1850, 2
      %v1959 = vrot.slane %v1851, 2
      %v1960 = vsel %vm713, %v1958, %v1959
      %v1961 = vrot.slane %v1852, 2
      %v1962 = vsel %vm713, %v1959, %v1961
      %v1963 = vrot.slane %v1853, 2
      %v1964 = vrot.slane %v1854, 2
      %v1965 = vsel %vm713, %v1963, %v1964
      %v1966 = vrot.slane %v1855, 2
      %v1967 = vsel %vm713, %v1964, %v1966
      %v1968 = vrot.slane %v1856, 2
      %v1969 = vrot.slane %v1857, 2
      %v1970 = vsel %vm713, %v1968, %v1969
      %v1971 = vrot.slane %v1858, 2
      %v1972 = vsel %vm713, %v1969, %v1971
      %v1973 = vrot.slane %v1859, 2
      %v1974 = vrot.slane %v1860, 2
      %v1975 = vsel %vm713, %v1973, %v1974
      %v1976 = vrot.slane %v1861, 2
      %v1977 = vsel %vm713, %v1974, %v1976
      %v1978 = vrot.slane %v1862, 2
      %v1979 = vrot.slane %v1863, 2
      %v1980 = vsel %vm713, %v1978, %v1979
      %v1981 = vrot.slane %v1864, 2
      %v1982 = vsel %vm713, %v1979, %v1981
      %v1983 = vrot.slane %v1865, 2
      %v1984 = vrot.slane %v1866, 2
      %v1985 = vsel %vm713, %v1983, %v1984
      %v1986 = vrot.slane %v1867, 2
      %v1987 = vsel %vm713, %v1984, %v1986
      %v1988 = vrot.slane %v1868, 2
      %v1989 = vrot.slane %v1869, 2
      %v1990 = vsel %vm713, %v1988, %v1989
      %v1991 = vrot.slane %v1870, 2
      %v1992 = vsel %vm713, %v1989, %v1991
      %v1993 = vrot.slane %v1871, 2
      %v1994 = vrot.slane %v1872, 2
      %v1995 = vsel %vm713, %v1993, %v1994
      %v1996 = vrot.slane %v1873, 2
      %v1997 = vsel %vm713, %v1994, %v1996
      %v1998 = vrot.slane %v1874, 2
      %v1999 = vrot.slane %v1875, 2
      %v2000 = vsel %vm713, %v1998, %v1999
      %v2001 = vrot.slane %v1876, 2
      %v2002 = vsel %vm713, %v1999, %v2001
      %v2003 = vrot.slane %v1877, 2
      %v2004 = vrot.slane %v1878, 2
      %v2005 = vsel %vm713, %v2003, %v2004
      %v2006 = vrot.slane %v1879, 2
      %v2007 = vsel %vm713, %v2004, %v2006
      %v2040 = vadd.f32 %v1796, %v1930
      %v2041 = vadd.f32 %v1797, %v1932
      %v2042 = vadd.f32 %v1798, %v1935
      %v2043 = vadd.f32 %v1799, %v1937
      %v2044 = vadd.f32 %v1800, %v1940
      %v2045 = vadd.f32 %v1801, %v1942
      %v2046 = vadd.f32 %v1802, %v1945
      %v2047 = vadd.f32 %v1803, %v1947
      %v2048 = vadd.f32 %v1804, %v1950
      %v2049 = vadd.f32 %v1805, %v1952
      %v2050 = vadd.f32 %v1806, %v1955
      %v2051 = vadd.f32 %v1807, %v1957
      %v2052 = vadd.f32 %v1808, %v1960
      %v2053 = vadd.f32 %v1809, %v1962
      %v2054 = vadd.f32 %v1810, %v1965
      %v2055 = vadd.f32 %v1811, %v1967
      %v2056 = vadd.f32 %v1812, %v1970
      %v2057 = vadd.f32 %v1813, %v1972
      %v2058 = vadd.f32 %v1814, %v1975
      %v2059 = vadd.f32 %v1815, %v1977
      %v2060 = vadd.f32 %v1816, %v1980
      %v2061 = vadd.f32 %v1817, %v1982
      %v2062 = vadd.f32 %v1818, %v1985
      %v2063 = vadd.f32 %v1819, %v1987
      %v2064 = vadd.f32 %v1820, %v1990
      %v2065 = vadd.f32 %v1821, %v1992
      %v2066 = vadd.f32 %v1822, %v1995
      %v2067 = vadd.f32 %v1823, %v1997
      %v2068 = vadd.f32 %v1824, %v2000
      %v2069 = vadd.f32 %v1825, %v2002
      %v2070 = vadd.f32 %v1826, %v2005
      %v2071 = vadd.f32 %v1827, %v2007
      %v2072 = vpack.c.bf16 %v2041, %v2040
      %v2073 = vpack.c.bf16 %v2043, %v2042
      %v2074 = vpack.c.bf16 %v2045, %v2044
      %v2075 = vpack.c.bf16 %v2047, %v2046
      %v2076 = vpack.c.bf16 %v2049, %v2048
      %v2077 = vpack.c.bf16 %v2051, %v2050
      %v2078 = vpack.c.bf16 %v2053, %v2052
      %v2079 = vpack.c.bf16 %v2055, %v2054
      %v2080 = vpack.c.bf16 %v2057, %v2056
      %v2081 = vpack.c.bf16 %v2059, %v2058
      %v2082 = vpack.c.bf16 %v2061, %v2060
      %v2083 = vpack.c.bf16 %v2063, %v2062
      %v2084 = vpack.c.bf16 %v2065, %v2064
      %v2085 = vpack.c.bf16 %v2067, %v2066
      %v2086 = vpack.c.bf16 %v2069, %v2068
      %v2087 = vpack.c.bf16 %v2071, %v2070
      %v2088 = vld [vmem:[%s2] sm:$0x3]
      %v2089 = vld [vmem:[%s3] sm:$0x1]
      %v2091 = vlaneseq
      %v2092 = vshrl.u32 %v2091, 7
      %v2093 = vsub.s32 0, %v2092
      %v2094 = vrot.slane %v2089, %v2093
      %vm2096 = vcmask 31744
      %v2098 = vsel %vm2096, %v2072, 0
      %v2101 = vsel %vm2096, %v2073, 0
      %v2104 = vsel %vm2096, %v2074, 0
      %v2107 = vsel %vm2096, %v2075, 0
      %v2110 = vsel %vm2096, %v2076, 0
      %v2113 = vsel %vm2096, %v2077, 0
      %v2116 = vsel %vm2096, %v2078, 0
      %v2119 = vsel %vm2096, %v2079, 0
      %v2122 = vsel %vm2096, %v2080, 0
      %v2125 = vsel %vm2096, %v2081, 0
      %v2128 = vsel %vm2096, %v2082, 0
      %v2131 = vsel %vm2096, %v2083, 0
      %v2134 = vsel %vm2096, %v2084, 0
      %v2137 = vsel %vm2096, %v2085, 0
      %v2140 = vsel %vm2096, %v2086, 0
      %v2143 = vsel %vm2096, %v2087, 0
      %vm2145 = vcmask 1041408
      %v2147 = vsel %vm2145, %v2088, 0
      %2149 = vmatprep.subr.bf16.mxu0 0
      %2150 = vmatpush1.bf16.msra.mxu0 0
      %2151 = vmatprep.subr.bf16.mxu0 0
      %2152 = vmatpush1.bf16.msra.mxu0 0
      %2153 = vmatprep.subr.bf16.mxu0 0
      %2154 = vmatpush1.bf16.msra.mxu0 0
      %2155 = vmatprep.subr.bf16.mxu0 0
      %2156 = vmatpush1.bf16.msra.mxu0 0
      %2157 = vmatprep.subr.bf16.mxu0 0
      %2158 = vmatpush1.bf16.msra.mxu0 0
      %2159 = vmatprep.subr.bf16.mxu0 0
      %2160 = vmatpush1.bf16.msra.mxu0 0
      %2161 = vmatprep.subr.bf16.mxu0 0
      %2162 = vmatpush1.bf16.msra.mxu0 0
      %2163 = vmatprep.subr.bf16.mxu0 0
      %2164 = vmatpush1.bf16.msra.mxu0 %v2147
      %2165 = vmatprep.subr.bf16.mxu0 0
      %2166 = vmatpush2.bf16.msra.mxu0 0
      %2167 = vmatprep.subr.bf16.mxu0 0
      %2168 = vmatpush2.bf16.msra.mxu0 0
      %2169 = vmatprep.subr.bf16.mxu0 0
      %2170 = vmatpush2.bf16.msra.mxu0 0
      %2171 = vmatprep.subr.bf16.mxu0 0
      %2172 = vmatpush2.bf16.msra.mxu0 0
      %2173 = vmatprep.subr.bf16.mxu0 0
      %2174 = vmatpush2.bf16.msra.mxu0 0
      %2175 = vmatprep.subr.bf16.mxu0 0
      %2176 = vmatpush2.bf16.msra.mxu0 0
      %2177 = vmatprep.subr.bf16.mxu0 0
      %2178 = vmatpush2.bf16.msra.mxu0 0
      %2179 = vmatprep.subr.bf16.mxu0 0
      %2180 = vmatpush2.bf16.msra.mxu0 0
      %2181 = vmatprep.mubr.bf16.mxu0 0
      %2182 = vmatmul.mubr.bf16.gmra.mxu0 %v2098
      %v2183 = vpop.f32.mrf.mxu0
      %v2184 = vadd.f32 %v2094, %v2183
      %v2185 = vpop.f32.mrf.mxu0
      %v2186 = vpop.f32.mrf.mxu0
      %v2187 = vadd.f32 %v2094, %v2186
      %v2188 = vpop.f32.mrf.mxu0
      %2189 = vmatprep.mubr.bf16.mxu0 0
      %2190 = vmatmul.mubr.bf16.gmra.mxu0 %v2101
      %v2191 = vpop.f32.mrf.mxu0
      %v2192 = vadd.f32 %v2094, %v2191
      %v2193 = vpop.f32.mrf.mxu0
      %v2194 = vpop.f32.mrf.mxu0
      %v2195 = vadd.f32 %v2094, %v2194
      %v2196 = vpop.f32.mrf.mxu0
      %2197 = vmatprep.mubr.bf16.mxu0 0
      %2198 = vmatmul.mubr.bf16.gmra.mxu0 %v2104
      %v2199 = vpop.f32.mrf.mxu0
      %v2200 = vadd.f32 %v2094, %v2199
      %v2201 = vpop.f32.mrf.mxu0
      %v2202 = vpop.f32.mrf.mxu0
      %v2203 = vadd.f32 %v2094, %v2202
      %v2204 = vpop.f32.mrf.mxu0
      %2205 = vmatprep.mubr.bf16.mxu0 0
      %2206 = vmatmul.mubr.bf16.gmra.mxu0 %v2107
      %v2207 = vpop.f32.mrf.mxu0
      %v2208 = vadd.f32 %v2094, %v2207
      %v2209 = vpop.f32.mrf.mxu0
      %v2210 = vpop.f32.mrf.mxu0
      %v2211 = vadd.f32 %v2094, %v2210
      %v2212 = vpop.f32.mrf.mxu0
      %2213 = vmatprep.mubr.bf16.mxu0 0
      %2214 = vmatmul.mubr.bf16.gmra.mxu0 %v2110
      %v2215 = vpop.f32.mrf.mxu0
      %v2216 = vadd.f32 %v2094, %v2215
      %v2217 = vpop.f32.mrf.mxu0
      %v2218 = vpop.f32.mrf.mxu0
      %v2219 = vadd.f32 %v2094, %v2218
      %v2220 = vpop.f32.mrf.mxu0
      %2221 = vmatprep.mubr.bf16.mxu0 0
      %2222 = vmatmul.mubr.bf16.gmra.mxu0 %v2113
      %v2223 = vpop.f32.mrf.mxu0
      %v2224 = vadd.f32 %v2094, %v2223
      %v2225 = vpop.f32.mrf.mxu0
      %v2226 = vpop.f32.mrf.mxu0
      %v2227 = vadd.f32 %v2094, %v2226
      %v2228 = vpop.f32.mrf.mxu0
      %2229 = vmatprep.mubr.bf16.mxu0 0
      %2230 = vmatmul.mubr.bf16.gmra.mxu0 %v2116
      %v2231 = vpop.f32.mrf.mxu0
      %v2232 = vadd.f32 %v2094, %v2231
      %v2233 = vpop.f32.mrf.mxu0
      %v2234 = vpop.f32.mrf.mxu0
      %v2235 = vadd.f32 %v2094, %v2234
      %v2236 = vpop.f32.mrf.mxu0
      %2237 = vmatprep.mubr.bf16.mxu0 0
      %2238 = vmatmul.mubr.bf16.gmra.mxu0 %v2119
      %v2239 = vpop.f32.mrf.mxu0
      %v2240 = vadd.f32 %v2094, %v2239
      %v2241 = vpop.f32.mrf.mxu0
      %v2242 = vpop.f32.mrf.mxu0
      %v2243 = vadd.f32 %v2094, %v2242
      %v2244 = vpop.f32.mrf.mxu0
      %2245 = vmatprep.mubr.bf16.mxu0 0
      %2246 = vmatmul.mubr.bf16.gmra.mxu0 %v2122
      %v2247 = vpop.f32.mrf.mxu0
      %v2248 = vadd.f32 %v2094, %v2247
      %v2249 = vpop.f32.mrf.mxu0
      %v2250 = vpop.f32.mrf.mxu0
      %v2251 = vadd.f32 %v2094, %v2250
      %v2252 = vpop.f32.mrf.mxu0
      %2253 = vmatprep.mubr.bf16.mxu0 0
      %2254 = vmatmul.mubr.bf16.gmra.mxu0 %v2125
      %v2255 = vpop.f32.mrf.mxu0
      %v2256 = vadd.f32 %v2094, %v2255
      %v2257 = vpop.f32.mrf.mxu0
      %v2258 = vpop.f32.mrf.mxu0
      %v2259 = vadd.f32 %v2094, %v2258
      %v2260 = vpop.f32.mrf.mxu0
      %2261 = vmatprep.mubr.bf16.mxu0 0
      %2262 = vmatmul.mubr.bf16.gmra.mxu0 %v2128
      %v2263 = vpop.f32.mrf.mxu0
      %v2264 = vadd.f32 %v2094, %v2263
      %v2265 = vpop.f32.mrf.mxu0
      %v2266 = vpop.f32.mrf.mxu0
      %v2267 = vadd.f32 %v2094, %v2266
      %v2268 = vpop.f32.mrf.mxu0
      %2269 = vmatprep.mubr.bf16.mxu0 0
      %2270 = vmatmul.mubr.bf16.gmra.mxu0 %v2131
      %v2271 = vpop.f32.mrf.mxu0
      %v2272 = vadd.f32 %v2094, %v2271
      %v2273 = vpop.f32.mrf.mxu0
      %v2274 = vpop.f32.mrf.mxu0
      %v2275 = vadd.f32 %v2094, %v2274
      %v2276 = vpop.f32.mrf.mxu0
      %2277 = vmatprep.mubr.bf16.mxu0 0
      %2278 = vmatmul.mubr.bf16.gmra.mxu0 %v2134
      %v2279 = vpop.f32.mrf.mxu0
      %v2280 = vadd.f32 %v2094, %v2279
      %v2281 = vpop.f32.mrf.mxu0
      %v2282 = vpop.f32.mrf.mxu0
      %v2283 = vadd.f32 %v2094, %v2282
      %v2284 = vpop.f32.mrf.mxu0
      %2285 = vmatprep.mubr.bf16.mxu0 0
      %2286 = vmatmul.mubr.bf16.gmra.mxu0 %v2137
      %v2287 = vpop.f32.mrf.mxu0
      %v2288 = vadd.f32 %v2094, %v2287
      %v2289 = vpop.f32.mrf.mxu0
      %v2290 = vpop.f32.mrf.mxu0
      %v2291 = vadd.f32 %v2094, %v2290
      %v2292 = vpop.f32.mrf.mxu0
      %2293 = vmatprep.mubr.bf16.mxu0 0
      %2294 = vmatmul.mubr.bf16.gmra.mxu0 %v2140
      %v2295 = vpop.f32.mrf.mxu0
      %v2296 = vadd.f32 %v2094, %v2295
      %v2297 = vpop.f32.mrf.mxu0
      %v2298 = vpop.f32.mrf.mxu0
      %v2299 = vadd.f32 %v2094, %v2298
      %v2300 = vpop.f32.mrf.mxu0
      %2301 = vmatprep.mubr.bf16.mxu0 0
      %2302 = vmatmul.mubr.bf16.gmra.mxu0 %v2143
      %v2303 = vpop.f32.mrf.mxu0
      %v2304 = vadd.f32 %v2094, %v2303
      %v2305 = vpop.f32.mrf.mxu0
      %v2306 = vpop.f32.mrf.mxu0
      %v2307 = vadd.f32 %v2094, %v2306
      %v2308 = vpop.f32.mrf.mxu0
      %2309 = vdwg.mxu0
      %v2310 = vmul.f32 %v2184, 0.5
      %v2311 = vmul.f32 %v2187, 0.5
      %v2312 = vmul.f32 %v2192, 0.5
      %v2313 = vmul.f32 %v2195, 0.5
      %v2314 = vmul.f32 %v2200, 0.5
      %v2315 = vmul.f32 %v2203, 0.5
      %v2316 = vmul.f32 %v2208, 0.5
      %v2317 = vmul.f32 %v2211, 0.5
      %v2318 = vmul.f32 %v2216, 0.5
      %v2319 = vmul.f32 %v2219, 0.5
      %v2320 = vmul.f32 %v2224, 0.5
      %v2321 = vmul.f32 %v2227, 0.5
      %v2322 = vmul.f32 %v2232, 0.5
      %v2323 = vmul.f32 %v2235, 0.5
      %v2324 = vmul.f32 %v2240, 0.5
      %v2325 = vmul.f32 %v2243, 0.5
      %v2326 = vmul.f32 %v2248, 0.5
      %v2327 = vmul.f32 %v2251, 0.5
      %v2328 = vmul.f32 %v2256, 0.5
      %v2329 = vmul.f32 %v2259, 0.5
      %v2330 = vmul.f32 %v2264, 0.5
      %v2331 = vmul.f32 %v2267, 0.5
      %v2332 = vmul.f32 %v2272, 0.5
      %v2333 = vmul.f32 %v2275, 0.5
      %v2334 = vmul.f32 %v2280, 0.5
      %v2335 = vmul.f32 %v2283, 0.5
      %v2336 = vmul.f32 %v2288, 0.5
      %v2337 = vmul.f32 %v2291, 0.5
      %v2338 = vmul.f32 %v2296, 0.5
      %v2339 = vmul.f32 %v2299, 0.5
      %v2340 = vmul.f32 %v2304, 0.5
      %v2341 = vmul.f32 %v2307, 0.5
      %v2342 = vmul.f32 %v2184, %v2184
      %v2343 = vmul.f32 %v2187, %v2187
      %v2344 = vmul.f32 %v2192, %v2192
      %v2345 = vmul.f32 %v2195, %v2195
      %v2346 = vmul.f32 %v2200, %v2200
      %v2347 = vmul.f32 %v2203, %v2203
      %v2348 = vmul.f32 %v2208, %v2208
      %v2349 = vmul.f32 %v2211, %v2211
      %v2350 = vmul.f32 %v2216, %v2216
      %v2351 = vmul.f32 %v2219, %v2219
      %v2352 = vmul.f32 %v2224, %v2224
      %v2353 = vmul.f32 %v2227, %v2227
      %v2354 = vmul.f32 %v2232, %v2232
      %v2355 = vmul.f32 %v2235, %v2235
      %v2356 = vmul.f32 %v2240, %v2240
      %v2357 = vmul.f32 %v2243, %v2243
      %v2358 = vmul.f32 %v2248, %v2248
      %v2359 = vmul.f32 %v2251, %v2251
      %v2360 = vmul.f32 %v2256, %v2256
      %v2361 = vmul.f32 %v2259, %v2259
      %v2362 = vmul.f32 %v2264, %v2264
      %v2363 = vmul.f32 %v2267, %v2267
      %v2364 = vmul.f32 %v2272, %v2272
      %v2365 = vmul.f32 %v2275, %v2275
      %v2366 = vmul.f32 %v2280, %v2280
      %v2367 = vmul.f32 %v2283, %v2283
      %v2368 = vmul.f32 %v2288, %v2288
      %v2369 = vmul.f32 %v2291, %v2291
      %v2370 = vmul.f32 %v2296, %v2296
      %v2371 = vmul.f32 %v2299, %v2299
      %v2372 = vmul.f32 %v2304, %v2304
      %v2373 = vmul.f32 %v2307, %v2307
      %v2374 = vmul.f32 %v2342, 0.035677407
      %v2375 = vmul.f32 %v2343, 0.035677407
      %v2376 = vmul.f32 %v2344, 0.035677407
      %v2377 = vmul.f32 %v2345, 0.035677407
      %v2378 = vmul.f32 %v2346, 0.035677407
      %v2379 = vmul.f32 %v2347, 0.035677407
      %v2380 = vmul.f32 %v2348, 0.035677407
      %v2381 = vmul.f32 %v2349, 0.035677407
      %v2382 = vmul.f32 %v2350, 0.035677407
      %v2383 = vmul.f32 %v2351, 0.035677407
      %v2384 = vmul.f32 %v2352, 0.035677407
      %v2385 = vmul.f32 %v2353, 0.035677407
      %v2386 = vmul.f32 %v2354, 0.035677407
      %v2387 = vmul.f32 %v2355, 0.035677407
      %v2388 = vmul.f32 %v2356, 0.035677407
      %v2389 = vmul.f32 %v2357, 0.035677407
      %v2390 = vmul.f32 %v2358, 0.035677407
      %v2391 = vmul.f32 %v2359, 0.035677407
      %v2392 = vmul.f32 %v2360, 0.035677407
      %v2393 = vmul.f32 %v2361, 0.035677407
      %v2394 = vmul.f32 %v2362, 0.035677407
      %v2395 = vmul.f32 %v2363, 0.035677407
      %v2396 = vmul.f32 %v2364, 0.035677407
      %v2397 = vmul.f32 %v2365, 0.035677407
      %v2398 = vmul.f32 %v2366, 0.035677407
      %v2399 = vmul.f32 %v2367, 0.035677407
      %v2400 = vmul.f32 %v2368, 0.035677407
      %v2401 = vmul.f32 %v2369, 0.035677407
      %v2402 = vmul.f32 %v2370, 0.035677407
      %v2403 = vmul.f32 %v2371, 0.035677407
      %v2404 = vmul.f32 %v2372, 0.035677407
      %v2405 = vmul.f32 %v2373, 0.035677407
      %v2406 = vadd.f32 %v2374, 0.7978846
      %v2407 = vadd.f32 %v2375, 0.7978846
      %v2408 = vadd.f32 %v2376, 0.7978846
      %v2409 = vadd.f32 %v2377, 0.7978846
      %v2410 = vadd.f32 %v2378, 0.7978846
      %v2411 = vadd.f32 %v2379, 0.7978846
      %v2412 = vadd.f32 %v2380, 0.7978846
      %v2413 = vadd.f32 %v2381, 0.7978846
      %v2414 = vadd.f32 %v2382, 0.7978846
      %v2415 = vadd.f32 %v2383, 0.7978846
      %v2416 = vadd.f32 %v2384, 0.7978846
      %v2417 = vadd.f32 %v2385, 0.7978846
      %v2418 = vadd.f32 %v2386, 0.7978846
      %v2419 = vadd.f32 %v2387, 0.7978846
      %v2420 = vadd.f32 %v2388, 0.7978846
      %v2421 = vadd.f32 %v2389, 0.7978846
      %v2422 = vadd.f32 %v2390, 0.7978846
      %v2423 = vadd.f32 %v2391, 0.7978846
      %v2424 = vadd.f32 %v2392, 0.7978846
      %v2425 = vadd.f32 %v2393, 0.7978846
      %v2426 = vadd.f32 %v2394, 0.7978846
      %v2427 = vadd.f32 %v2395, 0.7978846
      %v2428 = vadd.f32 %v2396, 0.7978846
      %v2429 = vadd.f32 %v2397, 0.7978846
      %v2430 = vadd.f32 %v2398, 0.7978846
      %v2431 = vadd.f32 %v2399, 0.7978846
      %v2432 = vadd.f32 %v2400, 0.7978846
      %v2433 = vadd.f32 %v2401, 0.7978846
      %v2434 = vadd.f32 %v2402, 0.7978846
      %v2435 = vadd.f32 %v2403, 0.7978846
      %v2436 = vadd.f32 %v2404, 0.7978846
      %v2437 = vadd.f32 %v2405, 0.7978846
      %v2438 = vmul.f32 %v2184, %v2406
      %v2439 = vmul.f32 %v2187, %v2407
      %v2440 = vmul.f32 %v2192, %v2408
      %v2441 = vmul.f32 %v2195, %v2409
      %v2442 = vmul.f32 %v2200, %v2410
      %v2443 = vmul.f32 %v2203, %v2411
      %v2444 = vmul.f32 %v2208, %v2412
      %v2445 = vmul.f32 %v2211, %v2413
      %v2446 = vmul.f32 %v2216, %v2414
      %v2447 = vmul.f32 %v2219, %v2415
      %v2448 = vmul.f32 %v2224, %v2416
      %v2449 = vmul.f32 %v2227, %v2417
      %v2450 = vmul.f32 %v2232, %v2418
      %v2451 = vmul.f32 %v2235, %v2419
      %v2452 = vmul.f32 %v2240, %v2420
      %v2453 = vmul.f32 %v2243, %v2421
      %v2454 = vmul.f32 %v2248, %v2422
      %v2455 = vmul.f32 %v2251, %v2423
      %v2456 = vmul.f32 %v2256, %v2424
      %v2457 = vmul.f32 %v2259, %v2425
      %v2458 = vmul.f32 %v2264, %v2426
      %v2459 = vmul.f32 %v2267, %v2427
      %v2460 = vmul.f32 %v2272, %v2428
      %v2461 = vmul.f32 %v2275, %v2429
      %v2462 = vmul.f32 %v2280, %v2430
      %v2463 = vmul.f32 %v2283, %v2431
      %v2464 = vmul.f32 %v2288, %v2432
      %v2465 = vmul.f32 %v2291, %v2433
      %v2466 = vmul.f32 %v2296, %v2434
      %v2467 = vmul.f32 %v2299, %v2435
      %v2468 = vmul.f32 %v2304, %v2436
      %v2469 = vmul.f32 %v2307, %v2437
      %v2470 = vtanh.pop %v2438
      %v2471 = vtanh.pop %v2439
      %v2472 = vtanh.pop %v2440
      %v2473 = vtanh.pop %v2441
      %v2474 = vtanh.pop %v2442
      %v2475 = vtanh.pop %v2443
      %v2476 = vtanh.pop %v2444
      %v2477 = vtanh.pop %v2445
      %v2478 = vtanh.pop %v2446
      %v2479 = vtanh.pop %v2447
      %v2480 = vtanh.pop %v2448
      %v2481 = vtanh.pop %v2449
      %v2482 = vtanh.pop %v2450
      %v2483 = vtanh.pop %v2451
      %v2484 = vtanh.pop %v2452
      %v2485 = vtanh.pop %v2453
      %v2486 = vtanh.pop %v2454
      %v2487 = vtanh.pop %v2455
      %v2488 = vtanh.pop %v2456
      %v2489 = vtanh.pop %v2457
      %v2490 = vtanh.pop %v2458
      %v2491 = vtanh.pop %v2459
      %v2492 = vtanh.pop %v2460
      %v2493 = vtanh.pop %v2461
      %v2494 = vtanh.pop %v2462
      %v2495 = vtanh.pop %v2463
      %v2496 = vtanh.pop %v2464
      %v2497 = vtanh.pop %v2465
      %v2498 = vtanh.pop %v2466
      %v2499 = vtanh.pop %v2467
      %v2500 = vtanh.pop %v2468
      %v2501 = vtanh.pop %v2469
      %v2502 = vadd.f32 %v2470, 1.0
      %v2503 = vadd.f32 %v2471, 1.0
      %v2504 = vadd.f32 %v2472, 1.0
      %v2505 = vadd.f32 %v2473, 1.0
      %v2506 = vadd.f32 %v2474, 1.0
      %v2507 = vadd.f32 %v2475, 1.0
      %v2508 = vadd.f32 %v2476, 1.0
      %v2509 = vadd.f32 %v2477, 1.0
      %v2510 = vadd.f32 %v2478, 1.0
      %v2511 = vadd.f32 %v2479, 1.0
      %v2512 = vadd.f32 %v2480, 1.0
      %v2513 = vadd.f32 %v2481, 1.0
      %v2514 = vadd.f32 %v2482, 1.0
      %v2515 = vadd.f32 %v2483, 1.0
      %v2516 = vadd.f32 %v2484, 1.0
      %v2517 = vadd.f32 %v2485, 1.0
      %v2518 = vadd.f32 %v2486, 1.0
      %v2519 = vadd.f32 %v2487, 1.0
      %v2520 = vadd.f32 %v2488, 1.0
      %v2521 = vadd.f32 %v2489, 1.0
      %v2522 = vadd.f32 %v2490, 1.0
      %v2523 = vadd.f32 %v2491, 1.0
      %v2524 = vadd.f32 %v2492, 1.0
      %v2525 = vadd.f32 %v2493, 1.0
      %v2526 = vadd.f32 %v2494, 1.0
      %v2527 = vadd.f32 %v2495, 1.0
      %v2528 = vadd.f32 %v2496, 1.0
      %v2529 = vadd.f32 %v2497, 1.0
      %v2530 = vadd.f32 %v2498, 1.0
      %v2531 = vadd.f32 %v2499, 1.0
      %v2532 = vadd.f32 %v2500, 1.0
      %v2533 = vadd.f32 %v2501, 1.0
      %v2534 = vmul.f32 %v2310, %v2502
      %v2535 = vmul.f32 %v2311, %v2503
      %v2536 = vmul.f32 %v2312, %v2504
      %v2537 = vmul.f32 %v2313, %v2505
      %v2538 = vmul.f32 %v2314, %v2506
      %v2539 = vmul.f32 %v2315, %v2507
      %v2540 = vmul.f32 %v2316, %v2508
      %v2541 = vmul.f32 %v2317, %v2509
      %v2542 = vmul.f32 %v2318, %v2510
      %v2543 = vmul.f32 %v2319, %v2511
      %v2544 = vmul.f32 %v2320, %v2512
      %v2545 = vmul.f32 %v2321, %v2513
      %v2546 = vmul.f32 %v2322, %v2514
      %v2547 = vmul.f32 %v2323, %v2515
      %v2548 = vmul.f32 %v2324, %v2516
      %v2549 = vmul.f32 %v2325, %v2517
      %v2550 = vmul.f32 %v2326, %v2518
      %v2551 = vmul.f32 %v2327, %v2519
      %v2552 = vmul.f32 %v2328, %v2520
      %v2553 = vmul.f32 %v2329, %v2521
      %v2554 = vmul.f32 %v2330, %v2522
      %v2555 = vmul.f32 %v2331, %v2523
      %v2556 = vmul.f32 %v2332, %v2524
      %v2557 = vmul.f32 %v2333, %v2525
      %v2558 = vmul.f32 %v2334, %v2526
      %v2559 = vmul.f32 %v2335, %v2527
      %v2560 = vmul.f32 %v2336, %v2528
      %v2561 = vmul.f32 %v2337, %v2529
      %v2562 = vmul.f32 %v2338, %v2530
      %v2563 = vmul.f32 %v2339, %v2531
      %v2564 = vmul.f32 %v2340, %v2532
      %v2565 = vmul.f32 %v2341, %v2533
      %v2566 = vpack.c.bf16 %v2535, %v2534
      %v2567 = vpack.c.bf16 %v2537, %v2536
      %v2568 = vpack.c.bf16 %v2539, %v2538
      %v2569 = vpack.c.bf16 %v2541, %v2540
      %v2570 = vpack.c.bf16 %v2543, %v2542
      %v2571 = vpack.c.bf16 %v2545, %v2544
      %v2572 = vpack.c.bf16 %v2547, %v2546
      %v2573 = vpack.c.bf16 %v2549, %v2548
      %v2574 = vpack.c.bf16 %v2551, %v2550
      %v2575 = vpack.c.bf16 %v2553, %v2552
      %v2576 = vpack.c.bf16 %v2555, %v2554
      %v2577 = vpack.c.bf16 %v2557, %v2556
      %v2578 = vpack.c.bf16 %v2559, %v2558
      %v2579 = vpack.c.bf16 %v2561, %v2560
      %v2580 = vpack.c.bf16 %v2563, %v2562
      %v2581 = vpack.c.bf16 %v2565, %v2564
      %v2582 = vld [vmem:[%s4] sm:$0xf]
      %v2583 = vld [vmem:[%s4 + $0x4] sm:$0xf]
      %v2584 = vld [vmem:[%s4 + $0x8] sm:$0xf]
      %v2585 = vld [vmem:[%s4 + $0xc] sm:$0xf]
      %v2586 = vld [vmem:[%s5] sm:$0x1]
      %v2588 = vlaneseq
      %v2589 = vshrl.u32 %v2588, 7
      %v2590 = vsub.s32 0, %v2589
      %v2591 = vrot.slane %v2586, %v2590
      %v2597 = vunpack.c.l.b16 %v2582
      %v2598 = vunpack.c.l.b16 %v2583
      %v2599 = vunpack.c.l.b16 %v2584
      %v2600 = vunpack.c.l.b16 %v2585
      %v2601 = vpack.c.b16 %v2598, %v2597
      %v2602 = vpack.c.b16 %v2600, %v2599
      %vm2605 = vcmask 261120
      %v2607 = vsel %vm2605, %v2566, 0
      %v2610 = vsel %vm2605, %v2567, 0
      %v2613 = vsel %vm2605, %v2568, 0
      %v2616 = vsel %vm2605, %v2569, 0
      %v2619 = vsel %vm2605, %v2570, 0
      %v2622 = vsel %vm2605, %v2571, 0
      %v2625 = vsel %vm2605, %v2572, 0
      %v2628 = vsel %vm2605, %v2573, 0
      %v2631 = vsel %vm2605, %v2574, 0
      %v2634 = vsel %vm2605, %v2575, 0
      %v2637 = vsel %vm2605, %v2576, 0
      %v2640 = vsel %vm2605, %v2577, 0
      %v2643 = vsel %vm2605, %v2578, 0
      %v2646 = vsel %vm2605, %v2579, 0
      %v2649 = vsel %vm2605, %v2580, 0
      %v2652 = vsel %vm2605, %v2581, 0
      %2654 = vmatprep.subr.bf16.mxu0 0
      %2655 = vmatpush1.bf16.msra.mxu0 0
      %2656 = vmatprep.subr.bf16.mxu0 0
      %2657 = vmatpush1.bf16.msra.mxu0 0
      %2658 = vmatprep.subr.bf16.mxu0 0
      %2659 = vmatpush1.bf16.msra.mxu0 0
      %2660 = vmatprep.subr.bf16.mxu0 0
      %2661 = vmatpush1.bf16.msra.mxu0 0
      %2662 = vmatprep.subr.bf16.mxu0 0
      %2663 = vmatpush1.bf16.msra.mxu0 0
      %2664 = vmatprep.subr.bf16.mxu0 0
      %2665 = vmatpush1.bf16.msra.mxu0 0
      %2666 = vmatprep.subr.bf16.mxu0 0
      %2667 = vmatpush1.bf16.msra.mxu0 %v2602
      %2668 = vmatprep.subr.bf16.mxu0 0
      %2669 = vmatpush1.bf16.msra.mxu0 %v2601
      %2670 = vmatprep.subr.bf16.mxu0 0
      %2671 = vmatpush2.bf16.msra.mxu0 0
      %2672 = vmatprep.subr.bf16.mxu0 0
      %2673 = vmatpush2.bf16.msra.mxu0 0
      %2674 = vmatprep.subr.bf16.mxu0 0
      %2675 = vmatpush2.bf16.msra.mxu0 0
      %2676 = vmatprep.subr.bf16.mxu0 0
      %2677 = vmatpush2.bf16.msra.mxu0 0
      %2678 = vmatprep.subr.bf16.mxu0 0
      %2679 = vmatpush2.bf16.msra.mxu0 0
      %2680 = vmatprep.subr.bf16.mxu0 0
      %2681 = vmatpush2.bf16.msra.mxu0 0
      %2682 = vmatprep.subr.bf16.mxu0 0
      %2683 = vmatpush2.bf16.msra.mxu0 0
      %2684 = vmatprep.subr.bf16.mxu0 0
      %2685 = vmatpush2.bf16.msra.mxu0 0
      %2686 = vmatprep.mubr.bf16.mxu0 0
      %2687 = vmatmul.mubr.bf16.gmra.mxu0 %v2607
      %v2688 = vpop.f32.mrf.mxu0
      %v2689 = vadd.f32 %v2591, %v2688
      %v2690 = vpop.f32.mrf.mxu0
      %v2691 = vpop.f32.mrf.mxu0
      %v2692 = vadd.f32 %v2591, %v2691
      %v2693 = vpop.f32.mrf.mxu0
      %2694 = vmatprep.mubr.bf16.mxu0 0
      %2695 = vmatmul.mubr.bf16.gmra.mxu0 %v2610
      %v2696 = vpop.f32.mrf.mxu0
      %v2697 = vadd.f32 %v2591, %v2696
      %v2698 = vpop.f32.mrf.mxu0
      %v2699 = vpop.f32.mrf.mxu0
      %v2700 = vadd.f32 %v2591, %v2699
      %v2701 = vpop.f32.mrf.mxu0
      %2702 = vmatprep.mubr.bf16.mxu0 0
      %2703 = vmatmul.mubr.bf16.gmra.mxu0 %v2613
      %v2704 = vpop.f32.mrf.mxu0
      %v2705 = vadd.f32 %v2591, %v2704
      %v2706 = vpop.f32.mrf.mxu0
      %v2707 = vpop.f32.mrf.mxu0
      %v2708 = vadd.f32 %v2591, %v2707
      %v2709 = vpop.f32.mrf.mxu0
      %2710 = vmatprep.mubr.bf16.mxu0 0
      %2711 = vmatmul.mubr.bf16.gmra.mxu0 %v2616
      %v2712 = vpop.f32.mrf.mxu0
      %v2713 = vadd.f32 %v2591, %v2712
      %v2714 = vpop.f32.mrf.mxu0
      %v2715 = vpop.f32.mrf.mxu0
      %v2716 = vadd.f32 %v2591, %v2715
      %v2717 = vpop.f32.mrf.mxu0
      %2718 = vmatprep.mubr.bf16.mxu0 0
      %2719 = vmatmul.mubr.bf16.gmra.mxu0 %v2619
      %v2720 = vpop.f32.mrf.mxu0
      %v2721 = vadd.f32 %v2591, %v2720
      %v2722 = vpop.f32.mrf.mxu0
      %v2723 = vpop.f32.mrf.mxu0
      %v2724 = vadd.f32 %v2591, %v2723
      %v2725 = vpop.f32.mrf.mxu0
      %2726 = vmatprep.mubr.bf16.mxu0 0
      %2727 = vmatmul.mubr.bf16.gmra.mxu0 %v2622
      %v2728 = vpop.f32.mrf.mxu0
      %v2729 = vadd.f32 %v2591, %v2728
      %v2730 = vpop.f32.mrf.mxu0
      %v2731 = vpop.f32.mrf.mxu0
      %v2732 = vadd.f32 %v2591, %v2731
      %v2733 = vpop.f32.mrf.mxu0
      %2734 = vmatprep.mubr.bf16.mxu0 0
      %2735 = vmatmul.mubr.bf16.gmra.mxu0 %v2625
      %v2736 = vpop.f32.mrf.mxu0
      %v2737 = vadd.f32 %v2591, %v2736
      %v2738 = vpop.f32.mrf.mxu0
      %v2739 = vpop.f32.mrf.mxu0
      %v2740 = vadd.f32 %v2591, %v2739
      %v2741 = vpop.f32.mrf.mxu0
      %2742 = vmatprep.mubr.bf16.mxu0 0
      %2743 = vmatmul.mubr.bf16.gmra.mxu0 %v2628
      %v2744 = vpop.f32.mrf.mxu0
      %v2745 = vadd.f32 %v2591, %v2744
      %v2746 = vpop.f32.mrf.mxu0
      %v2747 = vpop.f32.mrf.mxu0
      %v2748 = vadd.f32 %v2591, %v2747
      %v2749 = vpop.f32.mrf.mxu0
      %2750 = vmatprep.mubr.bf16.mxu0 0
      %2751 = vmatmul.mubr.bf16.gmra.mxu0 %v2631
      %v2752 = vpop.f32.mrf.mxu0
      %v2753 = vadd.f32 %v2591, %v2752
      %v2754 = vpop.f32.mrf.mxu0
      %v2755 = vpop.f32.mrf.mxu0
      %v2756 = vadd.f32 %v2591, %v2755
      %v2757 = vpop.f32.mrf.mxu0
      %2758 = vmatprep.mubr.bf16.mxu0 0
      %2759 = vmatmul.mubr.bf16.gmra.mxu0 %v2634
      %v2760 = vpop.f32.mrf.mxu0
      %v2761 = vadd.f32 %v2591, %v2760
      %v2762 = vpop.f32.mrf.mxu0
      %v2763 = vpop.f32.mrf.mxu0
      %v2764 = vadd.f32 %v2591, %v2763
      %v2765 = vpop.f32.mrf.mxu0
      %2766 = vmatprep.mubr.bf16.mxu0 0
      %2767 = vmatmul.mubr.bf16.gmra.mxu0 %v2637
      %v2768 = vpop.f32.mrf.mxu0
      %v2769 = vadd.f32 %v2591, %v2768
      %v2770 = vpop.f32.mrf.mxu0
      %v2771 = vpop.f32.mrf.mxu0
      %v2772 = vadd.f32 %v2591, %v2771
      %v2773 = vpop.f32.mrf.mxu0
      %2774 = vmatprep.mubr.bf16.mxu0 0
      %2775 = vmatmul.mubr.bf16.gmra.mxu0 %v2640
      %v2776 = vpop.f32.mrf.mxu0
      %v2777 = vadd.f32 %v2591, %v2776
      %v2778 = vpop.f32.mrf.mxu0
      %v2779 = vpop.f32.mrf.mxu0
      %v2780 = vadd.f32 %v2591, %v2779
      %v2781 = vpop.f32.mrf.mxu0
      %2782 = vmatprep.mubr.bf16.mxu0 0
      %2783 = vmatmul.mubr.bf16.gmra.mxu0 %v2643
      %v2784 = vpop.f32.mrf.mxu0
      %v2785 = vadd.f32 %v2591, %v2784
      %v2786 = vpop.f32.mrf.mxu0
      %v2787 = vpop.f32.mrf.mxu0
      %v2788 = vadd.f32 %v2591, %v2787
      %v2789 = vpop.f32.mrf.mxu0
      %2790 = vmatprep.mubr.bf16.mxu0 0
      %2791 = vmatmul.mubr.bf16.gmra.mxu0 %v2646
      %v2792 = vpop.f32.mrf.mxu0
      %v2793 = vadd.f32 %v2591, %v2792
      %v2794 = vpop.f32.mrf.mxu0
      %v2795 = vpop.f32.mrf.mxu0
      %v2796 = vadd.f32 %v2591, %v2795
      %v2797 = vpop.f32.mrf.mxu0
      %2798 = vmatprep.mubr.bf16.mxu0 0
      %2799 = vmatmul.mubr.bf16.gmra.mxu0 %v2649
      %v2800 = vpop.f32.mrf.mxu0
      %v2801 = vadd.f32 %v2591, %v2800
      %v2802 = vpop.f32.mrf.mxu0
      %v2803 = vpop.f32.mrf.mxu0
      %v2804 = vadd.f32 %v2591, %v2803
      %v2805 = vpop.f32.mrf.mxu0
      %2806 = vmatprep.mubr.bf16.mxu0 0
      %2807 = vmatmul.mubr.bf16.gmra.mxu0 %v2652
      %v2808 = vpop.f32.mrf.mxu0
      %v2809 = vadd.f32 %v2591, %v2808
      %v2810 = vpop.f32.mrf.mxu0
      %v2811 = vpop.f32.mrf.mxu0
      %v2812 = vadd.f32 %v2591, %v2811
      %v2813 = vpop.f32.mrf.mxu0
      %2814 = vdwg.mxu0
      %vm2847 = vcmask 1040384
      %v2848 = vrot.slane %v2689, 7
      %v2849 = vrot.slane %v2692, 7
      %v2850 = vsel %vm2847, %v2848, %v2849
      %v2851 = vrot.slane %v2697, 7
      %v2852 = vrot.slane %v2700, 7
      %v2853 = vsel %vm2847, %v2851, %v2852
      %v2854 = vrot.slane %v2705, 7
      %v2855 = vrot.slane %v2708, 7
      %v2856 = vsel %vm2847, %v2854, %v2855
      %v2857 = vrot.slane %v2713, 7
      %v2858 = vrot.slane %v2716, 7
      %v2859 = vsel %vm2847, %v2857, %v2858
      %v2860 = vrot.slane %v2721, 7
      %v2861 = vrot.slane %v2724, 7
      %v2862 = vsel %vm2847, %v2860, %v2861
      %v2863 = vrot.slane %v2729, 7
      %v2864 = vrot.slane %v2732, 7
      %v2865 = vsel %vm2847, %v2863, %v2864
      %v2866 = vrot.slane %v2737, 7
      %v2867 = vrot.slane %v2740, 7
      %v2868 = vsel %vm2847, %v2866, %v2867
      %v2869 = vrot.slane %v2745, 7
      %v2870 = vrot.slane %v2748, 7
      %v2871 = vsel %vm2847, %v2869, %v2870
      %v2872 = vrot.slane %v2753, 7
      %v2873 = vrot.slane %v2756, 7
      %v2874 = vsel %vm2847, %v2872, %v2873
      %v2875 = vrot.slane %v2761, 7
      %v2876 = vrot.slane %v2764, 7
      %v2877 = vsel %vm2847, %v2875, %v2876
      %v2878 = vrot.slane %v2769, 7
      %v2879 = vrot.slane %v2772, 7
      %v2880 = vsel %vm2847, %v2878, %v2879
      %v2881 = vrot.slane %v2777, 7
      %v2882 = vrot.slane %v2780, 7
      %v2883 = vsel %vm2847, %v2881, %v2882
      %v2884 = vrot.slane %v2785, 7
      %v2885 = vrot.slane %v2788, 7
      %v2886 = vsel %vm2847, %v2884, %v2885
      %v2887 = vrot.slane %v2793, 7
      %v2888 = vrot.slane %v2796, 7
      %v2889 = vsel %vm2847, %v2887, %v2888
      %v2890 = vrot.slane %v2801, 7
      %v2891 = vrot.slane %v2804, 7
      %v2892 = vsel %vm2847, %v2890, %v2891
      %v2893 = vrot.slane %v2809, 7
      %v2894 = vrot.slane %v2812, 7
      %v2895 = vsel %vm2847, %v2893, %v2894
      %v2944 = vadd.f32 %v861, %v2848
      %v2945 = vadd.f32 %v862, %v2850
      %v2946 = vadd.f32 %v863, %v2849
      %v2947 = vadd.f32 %v864, %v2851
      %v2948 = vadd.f32 %v865, %v2853
      %v2949 = vadd.f32 %v866, %v2852
      %v2950 = vadd.f32 %v867, %v2854
      %v2951 = vadd.f32 %v868, %v2856
      %v2952 = vadd.f32 %v869, %v2855
      %v2953 = vadd.f32 %v870, %v2857
      %v2954 = vadd.f32 %v871, %v2859
      %v2955 = vadd.f32 %v872, %v2858
      %v2956 = vadd.f32 %v873, %v2860
      %v2957 = vadd.f32 %v874, %v2862
      %v2958 = vadd.f32 %v875, %v2861
      %v2959 = vadd.f32 %v876, %v2863
      %v2960 = vadd.f32 %v877, %v2865
      %v2961 = vadd.f32 %v878, %v2864
      %v2962 = vadd.f32 %v879, %v2866
      %v2963 = vadd.f32 %v880, %v2868
      %v2964 = vadd.f32 %v881, %v2867
      %v2965 = vadd.f32 %v882, %v2869
      %v2966 = vadd.f32 %v883, %v2871
      %v2967 = vadd.f32 %v884, %v2870
      %v2968 = vadd.f32 %v885, %v2872
      %v2969 = vadd.f32 %v886, %v2874
      %v2970 = vadd.f32 %v887, %v2873
      %v2971 = vadd.f32 %v888, %v2875
      %v2972 = vadd.f32 %v889, %v2877
      %v2973 = vadd.f32 %v890, %v2876
      %v2974 = vadd.f32 %v891, %v2878
      %v2975 = vadd.f32 %v892, %v2880
      %v2976 = vadd.f32 %v893, %v2879
      %v2977 = vadd.f32 %v894, %v2881
      %v2978 = vadd.f32 %v895, %v2883
      %v2979 = vadd.f32 %v896, %v2882
      %v2980 = vadd.f32 %v897, %v2884
      %v2981 = vadd.f32 %v898, %v2886
      %v2982 = vadd.f32 %v899, %v2885
      %v2983 = vadd.f32 %v900, %v2887
      %v2984 = vadd.f32 %v901, %v2889
      %v2985 = vadd.f32 %v902, %v2888
      %v2986 = vadd.f32 %v903, %v2890
      %v2987 = vadd.f32 %v904, %v2892
      %v2988 = vadd.f32 %v905, %v2891
      %v2989 = vadd.f32 %v906, %v2893
      %v2990 = vadd.f32 %v907, %v2895
      %v2991 = vadd.f32 %v908, %v2894
      %vm2992 = vcmask 31745
      %2993 = vst.msk [vmem:[%s275 - $0x1] sm:$0xfe] %vm2992, %v2944
      %2994 = vst.msk [vmem:[%s275 + $0x7] sm:$0xff] %vm2096, %v2945
      %vm2995 = vcmask 24576
      %2996 = vst.msk [vmem:[%s275 + $0xf] sm:$0x1] %vm2995, %v2946
      %2997 = vst.msk [vmem:[%s275 + $0xf] sm:$0xfe] %vm2992, %v2947
      %2998 = vst.msk [vmem:[%s275 + $0x17] sm:$0xff] %vm2096, %v2948
      %2999 = vst.msk [vmem:[%s275 + $0x1f] sm:$0x1] %vm2995, %v2949
      %3000 = vst.msk [vmem:[%s275 + $0x1f] sm:$0xfe] %vm2992, %v2950
      %3001 = vst.msk [vmem:[%s275 + $0x27] sm:$0xff] %vm2096, %v2951
      %3002 = vst.msk [vmem:[%s275 + $0x2f] sm:$0x1] %vm2995, %v2952
      %3003 = vst.msk [vmem:[%s275 + $0x2f] sm:$0xfe] %vm2992, %v2953
      %3004 = vst.msk [vmem:[%s275 + $0x37] sm:$0xff] %vm2096, %v2954
      %3005 = vst.msk [vmem:[%s275 + $0x3f] sm:$0x1] %vm2995, %v2955
      %3006 = vst.msk [vmem:[%s275 + $0x3f] sm:$0xfe] %vm2992, %v2956
      %3007 = vst.msk [vmem:[%s275 + $0x47] sm:$0xff] %vm2096, %v2957
      %3008 = vst.msk [vmem:[%s275 + $0x4f] sm:$0x1] %vm2995, %v2958
      %3009 = vst.msk [vmem:[%s275 + $0x4f] sm:$0xfe] %vm2992, %v2959
      %3010 = vst.msk [vmem:[%s275 + $0x57] sm:$0xff] %vm2096, %v2960
      %3011 = vst.msk [vmem:[%s275 + $0x5f] sm:$0x1] %vm2995, %v2961
      %3012 = vst.msk [vmem:[%s275 + $0x5f] sm:$0xfe] %vm2992, %v2962
      %3013 = vst.msk [vmem:[%s275 + $0x67] sm:$0xff] %vm2096, %v2963
      %3014 = vst.msk [vmem:[%s275 + $0x6f] sm:$0x1] %vm2995, %v2964
      %3015 = vst.msk [vmem:[%s275 + $0x6f] sm:$0xfe] %vm2992, %v2965
      %3016 = vst.msk [vmem:[%s275 + $0x77] sm:$0xff] %vm2096, %v2966
      %3017 = vst.msk [vmem:[%s275 + $0x7f] sm:$0x1] %vm2995, %v2967
      %3018 = vst.msk [vmem:[%s275 + $0x7f] sm:$0xfe] %vm2992, %v2968
      %3019 = vst.msk [vmem:[%s275 + $0x87] sm:$0xff] %vm2096, %v2969
      %3020 = vst.msk [vmem:[%s275 + $0x8f] sm:$0x1] %vm2995, %v2970
      %3021 = vst.msk [vmem:[%s275 + $0x8f] sm:$0xfe] %vm2992, %v2971
      %3022 = vst.msk [vmem:[%s275 + $0x97] sm:$0xff] %vm2096, %v2972
      %3023 = vst.msk [vmem:[%s275 + $0x9f] sm:$0x1] %vm2995, %v2973
      %3024 = vst.msk [vmem:[%s275 + $0x9f] sm:$0xfe] %vm2992, %v2974
      %3025 = vst.msk [vmem:[%s275 + $0xa7] sm:$0xff] %vm2096, %v2975
      %3026 = vst.msk [vmem:[%s275 + $0xaf] sm:$0x1] %vm2995, %v2976
      %3027 = vst.msk [vmem:[%s275 + $0xaf] sm:$0xfe] %vm2992, %v2977
      %3028 = vst.msk [vmem:[%s275 + $0xb7] sm:$0xff] %vm2096, %v2978
      %3029 = vst.msk [vmem:[%s275 + $0xbf] sm:$0x1] %vm2995, %v2979
      %3030 = vst.msk [vmem:[%s275 + $0xbf] sm:$0xfe] %vm2992, %v2980
      %3031 = vst.msk [vmem:[%s275 + $0xc7] sm:$0xff] %vm2096, %v2981
      %3032 = vst.msk [vmem:[%s275 + $0xcf] sm:$0x1] %vm2995, %v2982
      %3033 = vst.msk [vmem:[%s275 + $0xcf] sm:$0xfe] %vm2992, %v2983
      %3034 = vst.msk [vmem:[%s275 + $0xd7] sm:$0xff] %vm2096, %v2984
      %3035 = vst.msk [vmem:[%s275 + $0xdf] sm:$0x1] %vm2995, %v2985
      %3036 = vst.msk [vmem:[%s275 + $0xdf] sm:$0xfe] %vm2992, %v2986
      %3037 = vst.msk [vmem:[%s275 + $0xe7] sm:$0xff] %vm2096, %v2987
      %3038 = vst.msk [vmem:[%s275 + $0xef] sm:$0x1] %vm2995, %v2988
      %3039 = vst.msk [vmem:[%s275 + $0xef] sm:$0xfe] %vm2992, %v2989
      %3040 = vst.msk [vmem:[%s275 + $0xf7] sm:$0xff] %vm2096, %v2990
      %3041 = vst.msk [vmem:[%s275 + $0xff] sm:$0x1] %vm2995, %v2991
      %s3042 = smul.u32 16, %s22
      %p3043 = scmp.lt.s32.totalorder %s21, 1
      %s3044 = scalar_select %p3043, %s21, 1
      %p3045 = scmp.lt.s32.totalorder %s3042, 15
      %s3046 = scalar_select %p3045, %s3042, 15
      %s3047 = smul.addr %s3046, 2
      %s3048 = smul.addr %s3044, 32
      %s3049 = sadd.s32 %s3047, %s3048
      %s3050 = smul.addr %s3049, 8
      %s3051 = scalar_lea.vmem %s6, %s3050
      // Predicated region
      $region45: #{tpu_custom_call.1} parent=43 // pred_check
        %p3052 = pneg %p180
      $region46: #{tpu_custom_call.1} parent=43 // pred_check_branch
        %3054 = sbr.rel (%p3052) target = $region48
      $region47: #{tpu_custom_call.1} parent=43 // pred_region
        %s3055 = smul.u32 16, %s22
      $region48: #{tpu_custom_call.1} parent=43 // pred_fallthru
        _
    $region44: #{tpu_custom_call.1} parent=5 // pred_fallthru
      _
    %p3056 = scmp.le.s32.totalorder 2, %s12
    // Predicated region
    $region49: #{tpu_custom_call.1} parent=5 // pred_check
      %p3057 = pneg %p3056
    $region50: #{tpu_custom_call.1} parent=5 // pred_check_branch
      %3059 = sbr.rel (%p3057) target = $region52
    $region51: #{tpu_custom_call.1} parent=5 // pred_region
      %s3060 = ssub.s32 %s12, 2
      // Predicated region
      $region53: #{tpu_custom_call.1} parent=51 // pred_check
        %p3061 = pneg %p186
      $region54: #{tpu_custom_call.1} parent=51 // pred_check_branch
        %3063 = sbr.rel (%p3061) target = $region56
      $region55: #{tpu_custom_call.1} parent=51 // pred_region
        %s3064 = smul.u32 16, %s24
        %p3065 = scmp.lt.s32.totalorder %s23, 1
        %s3066 = scalar_select %p3065, %s23, 1
        %p3067 = scmp.lt.s32.totalorder %s3064, 15
        %s3068 = scalar_select %p3067, %s3064, 15
        %s3069 = smul.addr %s3068, 2
        %s3070 = smul.addr %s3066, 32
        %s3071 = sadd.s32 %s3069, %s3070
        %s3072 = smul.addr %s3071, 8
        %s3073 = scalar_lea.vmem %s6, %s3072
      $region56: #{tpu_custom_call.1} parent=51 // pred_fallthru
        _
    $region52: #{tpu_custom_call.1} parent=5 // pred_fallthru
      _
  $region6: #{tpu_custom_call.1} parent=0 // loop_footer
    %s16 = sadd.s32 1, %s12
  $region7: #{tpu_custom_call.1} parent=0 // loop_footer_branch
    %11 = sbr.rel target = $region3
  $region8: #{tpu_custom_call.1} parent=0 // loop_exit
    _

</llo_original>
